<compile_context>
chip_gen: v7x
topology: tpu7x:2x2x1
jax: 0.10.0
libtpu: 0.0.40
codegen_flags: <defaults>
</compile_context>

<pallas_src>
from functools import partial

import jax
import jax.numpy as jnp
from jax.experimental import pallas as pl
from jax.experimental.pallas import tpu as pltpu


CFG = dict(
    num_tokens=32, num_speakers=4, encoder_dim=16,
    duration_predictor_dim=16, upsampling_dim=16,
    decoder_dim=16, decoder_num_blocks=2, n_mels=8,
)


# ----------------------------------------------------------------------------
# In-kernel helpers (VMEM-resident values; bf16 MXU inputs, f32 accumulation)
# ----------------------------------------------------------------------------

def _linear(x, w, b, act=None):
    """y = act(x @ w + b); x f32, w bf16, accumulate f32."""
    y = jnp.dot(x.astype(jnp.bfloat16), w, preferred_element_type=jnp.float32) + b
    if act == "relu":
        y = jnp.maximum(y, 0.0)
    elif act == "softplus":
        # numerically stable softplus (exp/log on the EUP, rest on the VPU)
        y = jnp.log(1.0 + jnp.exp(-jnp.abs(y))) + jnp.maximum(y, 0.0)
    return y


def _conv3(x, w_flat, b):
    """'same' conv1d (kernel=3) + ReLU over the row (time) axis of x.

    x:      (R, Cin) f32, one sequence.
    w_flat: (3*Cin, Cout) bf16, taps stacked along rows (tap0|tap1|tap2).
    The shifted taps are built with pltpu.roll (XLU, stays in VMEM) and masked
    at the sequence boundary (implicit zero padding), then concatenated along
    the lane axis so the whole conv is ONE (R,3*Cin)@(3*Cin,Cout) MXU matmul.
    """
    r, _ = x.shape
    rows = jax.lax.broadcasted_iota(jnp.int32, (r, 1), 0)
    x_prev = jnp.where(rows >= 1, pltpu.roll(x, shift=1, axis=0), 0.0)
    x_next = jnp.where(rows <= r - 2, pltpu.roll(x, shift=r - 1, axis=0), 0.0)
    # TODO(synk): on v6e/v7x the roll/mask could stay in bf16 (half the vreg
    # traffic); kept f32 here so the same kernel lowers cleanly on v5e.
    xcat = jnp.concatenate([x_prev, x, x_next], axis=-1).astype(jnp.bfloat16)
    y = jnp.dot(xcat, w_flat, preferred_element_type=jnp.float32) + b
    return jnp.maximum(y, 0.0)


# ----------------------------------------------------------------------------
# Fused forward kernel (one grid step == one batch element)
# ----------------------------------------------------------------------------

def _pt2_fused_kernel(
        # scalar prefetch (SMEM)
        len_ref,                                   # (N,) int32 valid token counts
        # activations
        x_ref,                                     # (W, enc) f32
        # encoder
        enc_cw_ref, enc_cb_ref,                    # (3*enc, enc) bf16, (1, enc) f32
        eproj_w_ref, eproj_b1_ref, eproj_b2_ref,   # folded enc_out @ enc_proj
        # duration predictor
        dp1_w_ref, dp1_b_ref, dp2_w_ref, dp2_b_ref,
        dur_w_ref, dur_b_ref, upf_w_ref, upf_b_ref,
        # decoder
        dec_in_w_ref, dec_in_b_ref, dec_cw_ref, dec_cb_ref,
        dec_ow_ref, dec_ob_ref,
        # outputs
        mel_ref, dur_ref):
    f32 = jnp.float32
    n = pl.program_id(0)
    w_len = x_ref.shape[0]
    t_len = mel_ref.shape[0]
    n_blocks = dec_cw_ref.shape[0]
    seq_len = len_ref[n]                                        # scalar int32

    rows_w = jax.lax.broadcasted_iota(jnp.int32, (w_len, 1), 0)
    mask_col = (rows_w < seq_len).astype(f32)                   # (W,1) valid tokens

    # ---------------- Encoder ----------------
    x = x_ref[...] * mask_col                       # zero padded token embeddings
    x = _conv3(x, enc_cw_ref[...], enc_cb_ref[...])
    # TODO(synk): encoder BiLSTM stand-in.  Linear(enc->2enc) and
    # encoder_projection(2enc->dpd) are host-folded into one matmul; the
    # per-row mask commutes with the right matmul, so semantics are preserved.
    x = jnp.dot(x.astype(jnp.bfloat16), eproj_w_ref[...],
                preferred_element_type=f32) + eproj_b1_ref[...]
    x = x * mask_col + eproj_b2_ref[...]                        # (W, dpd)

    # ---------------- DurationPredictor ----------------
    # TODO(synk): LConv block stand-in (two conv1d(k=3)+ReLU layers).
    h = _conv3(x, dp1_w_ref[...], dp1_b_ref[...])
    h = _conv3(h, dp2_w_ref[...], dp2_b_ref[...])
    d = _linear(h, dur_w_ref[...], dur_b_ref[...], act="softplus") * mask_col  # (W,1)
    feat = _linear(h, upf_w_ref[...], upf_b_ref[...])                          # (W,up)

    # ---------------- Upsampling (Gaussian attention over tokens) ----------
    # centers_j = cumsum(d)_j - 0.5*d_j via a single (1,W)x(W,W) matmul that
    # also relayouts column->row (jnp.cumsum has no Mosaic lowering).
    iw = jax.lax.broadcasted_iota(jnp.int32, (w_len, w_len), 0)
    jw = jax.lax.broadcasted_iota(jnp.int32, (w_len, w_len), 1)
    cums = (iw <= jw).astype(f32) - 0.5 * (iw == jw).astype(f32)
    ones_row = jnp.ones((1, w_len), f32)
    centers = jnp.dot(ones_row, cums * d, preferred_element_type=f32)   # (1, W)
    total = jnp.dot(ones_row, d, preferred_element_type=f32)            # (1, 1)

    t_col = jax.lax.broadcasted_iota(jnp.int32, (t_len, 1), 0).astype(f32) + 0.5
    diff = t_col - centers                                              # (T, W)
    scores = -(diff * diff)
    jt = jax.lax.broadcasted_iota(jnp.int32, (t_len, w_len), 1)
    scores = jnp.where(jt < seq_len, scores, -1e9)                      # mask pads
    m = jnp.max(scores, axis=-1, keepdims=True)
    e = jnp.exp(scores - m)
    s = jnp.sum(e, axis=-1, keepdims=True)
    attn = e * pl.reciprocal(s, approx=True)                            # (T, W)
    up = jnp.dot(attn.astype(jnp.bfloat16), feat.astype(jnp.bfloat16),
                 preferred_element_type=f32)                            # (T, up)
    frame_ok = ((t_col - 0.5) < total).astype(f32)                      # (T, 1)
    up = up * frame_ok               # zero frames past the predicted total duration
                                     # BEFORE the decoder convs (no boundary leak)

    # ---------------- Decoder ----------------
    y = _linear(up, dec_in_w_ref[...], dec_in_b_ref[...], act="relu")
    for blk in range(n_blocks):
        y = _conv3(y, dec_cw_ref[blk], dec_cb_ref[blk])
    mel = jnp.dot(y.astype(jnp.bfloat16), dec_ow_ref[...],
                  preferred_element_type=f32) + dec_ob_ref[...]         # (T, n_mels)
    mel_ref[...] = mel * frame_ok
    dur_ref[...] = d


# ----------------------------------------------------------------------------
# Parameters
# ----------------------------------------------------------------------------

def init_params(key, cfg):
    enc, dpd = cfg["encoder_dim"], cfg["duration_predictor_dim"]
    up, dec, nmel = cfg["upsampling_dim"], cfg["decoder_dim"], cfg["n_mels"]
    keys = iter(jax.random.split(key, 64))

    def w(shape, scale=0.1):
        return scale * jax.random.normal(next(keys), shape, dtype=jnp.float32)

    def zeros(shape):
        return jnp.zeros(shape, jnp.float32)

    return {
        "tok_emb": w((cfg["num_tokens"], enc), 1.0),
        "spk_emb": w((cfg["num_speakers"], enc), 1.0),
        "enc_conv_w": w((3, enc, enc)), "enc_conv_b": zeros((enc,)),
        "enc_out_w": w((enc, 2 * enc)), "enc_out_b": zeros((2 * enc,)),
        "enc_proj_w": w((2 * enc, dpd)), "enc_proj_b": zeros((dpd,)),
        "dp_conv1_w": w((3, dpd, dpd)), "dp_conv1_b": zeros((dpd,)),
        "dp_conv2_w": w((3, dpd, dpd)), "dp_conv2_b": zeros((dpd,)),
        "dp_dur_w": w((dpd, 1)), "dp_dur_b": zeros((1,)),
        "up_proj_w": w((dpd, up)), "up_proj_b": zeros((up,)),
        "dec_in_w": w((up, dec)), "dec_in_b": zeros((dec,)),
        "dec_conv_w": [w((3, dec, dec)) for _ in range(cfg["decoder_num_blocks"])],
        "dec_conv_b": [zeros((dec,)) for _ in range(cfg["decoder_num_blocks"])],
        "dec_out_w": w((dec, nmel)), "dec_out_b": zeros((nmel,)),
    }


# ----------------------------------------------------------------------------
# Forward wrapper (plain-JAX glue: embedding gathers + host-side weight prep)
# ----------------------------------------------------------------------------

@partial(jax.jit, static_argnames=("T",))
def parallel_tacotron2_forward(params, text, text_mask, speaker, T):
    cfg = CFG
    N, W = text.shape
    enc, dpd = cfg["encoder_dim"], cfg["duration_predictor_dim"]
    up, dec, nmel = cfg["upsampling_dim"], cfg["decoder_dim"], cfg["n_mels"]
    nb = cfg["decoder_num_blocks"]
    f32, bf16 = jnp.float32, jnp.bfloat16

    lengths = jnp.sum(text_mask > 0, axis=-1).astype(jnp.int32)          # (N,)

    # Embedding gathers stay as plain-JAX glue (cheap, not MXU work).
    x = jnp.take(params["tok_emb"], text, axis=0)                        # (N, W, enc)
    x = x + jnp.take(params["spk_emb"], speaker, axis=0)[:, None, :]
    x_flat = x.reshape(N * W, enc).astype(f32)

    def cw(a):      # conv weight (3, Cin, Cout) -> (3*Cin, Cout) bf16
        return a.reshape(a.shape[0] * a.shape[1], a.shape[2]).astype(bf16)

    def row(b):     # bias -> (1, C) f32
        return b.reshape(1, -1).astype(f32)

    # Fold encoder output Linear + encoder_projection into one (enc, dpd) matmul.
    eproj_w = jnp.dot(params["enc_out_w"], params["enc_proj_w"]).astype(bf16)
    eproj_b1 = jnp.dot(params["enc_out_b"].reshape(1, -1),
                       params["enc_proj_w"]).astype(f32)
    eproj_b2 = row(params["enc_proj_b"])

    inputs = [
        x_flat,
        cw(params["enc_conv_w"]), row(params["enc_conv_b"]),
        eproj_w, eproj_b1, eproj_b2,
        cw(params["dp_conv1_w"]), row(params["dp_conv1_b"]),
        cw(params["dp_conv2_w"]), row(params["dp_conv2_b"]),
        params["dp_dur_w"].astype(bf16), row(params["dp_dur_b"]),
        params["up_proj_w"].astype(bf16), row(params["up_proj_b"]),
        params["dec_in_w"].astype(bf16), row(params["dec_in_b"]),
        jnp.stack([cw(w_) for w_ in params["dec_conv_w"]]),              # (nb,3*dec,dec)
        jnp.stack([row(b_) for b_ in params["dec_conv_b"]]),             # (nb,1,dec)
        params["dec_out_w"].astype(bf16), row(params["dec_out_b"]),
    ]

    def const_spec(shape):
        # Constant block index across the grid: weights stay resident and are
        # not re-DMA'd per step.
        # TODO(synk): mark these pl.Buffered(1) once the row axes are tiled.
        if len(shape) == 2:
            return pl.BlockSpec(shape, lambda n, lens: (0, 0))
        return pl.BlockSpec(shape, lambda n, lens: (0, 0, 0))

    in_specs = ([pl.BlockSpec((W, enc), lambda n, lens: (n, 0))]
                + [const_spec(a.shape) for a in inputs[1:]])

    # Advisory cost estimate so XLA overlaps this call with the gather glue.
    flops = int(N * (
        2 * W * (3 * enc) * enc            # encoder conv
        + 2 * W * enc * dpd                # folded projection
        + 2 * (2 * W * (3 * dpd) * dpd)    # dp convs
        + 2 * W * dpd + 2 * W * dpd * up   # duration / upsampling features
        + 2 * W * W + 2 * W                # prefix-sum matmuls
        + 2 * T * W * up                   # attention
        + 2 * T * up * dec                 # decoder in
        + nb * (2 * T * (3 * dec) * dec)   # decoder convs
        + 2 * T * dec * nmel))             # mel projection
    transcendentals = int(N * (T * W + 3 * W))
    bytes_accessed = int(sum(a.size * a.dtype.itemsize for a in inputs)
                         + N * T * nmel * 4 + N * W * 4 + N * 4)

    mel2d, dur_col = pl.pallas_call(
        _pt2_fused_kernel,
        out_shape=(jax.ShapeDtypeStruct((N * T, nmel), f32),
                   jax.ShapeDtypeStruct((N * W, 1), f32)),
        grid_spec=pltpu.PrefetchScalarGridSpec(
            num_scalar_prefetch=1,
            grid=(N,),
            in_specs=in_specs,
            out_specs=[pl.BlockSpec((T, nmel), lambda n, lens: (n, 0)),
                       pl.BlockSpec((W, 1), lambda n, lens: (n, 0))]),
        compiler_params=pltpu.CompilerParams(
            dimension_semantics=("parallel",),          # megacore / 2-TC split
            vmem_limit_bytes=48 * 1024 * 1024),          # fits v7x's 64 MiB
        cost_estimate=pl.CostEstimate(flops=flops,
                                      transcendentals=transcendentals,
                                      bytes_accessed=bytes_accessed),
    )(lengths, *inputs)

    mel = mel2d.reshape(N, T, nmel)
    durations = dur_col.reshape(N, W)
    return mel, durations


# ----------------------------------------------------------------------------
# Main
# ----------------------------------------------------------------------------

if __name__ == "__main__":
    key = jax.random.PRNGKey(0)
    k_param, k_text = jax.random.split(key)
    params = init_params(k_param, CFG)

    N, W, T = 2, 8, 24
    text = jax.random.randint(k_text, (N, W), 0, CFG["num_tokens"], dtype=jnp.int32)
    lengths = jnp.array([8, 6], dtype=jnp.int32)
    text_mask = (jnp.arange(W)[None, :] < lengths[:, None]).astype(jnp.float32)
    speaker = jnp.array([0, 1], dtype=jnp.int32)

    mel, durations = parallel_tacotron2_forward(params, text, text_mask, speaker, T=T)
    jax.block_until_ready(mel)
    jax.block_until_ready(durations)

    assert mel.shape == (N, T, CFG["n_mels"])
    assert durations.shape == (N, W)
    assert bool(jnp.all(jnp.isfinite(mel))) and bool(jnp.all(jnp.isfinite(durations)))
    print("KERNEL_OK")
</pallas_src>

<mosaic_0001>
module attributes {stable_mosaic.version = 11 : i64} {
  func.func @_pt2_fused_kernel(%arg0: i32, %arg1: memref<2xi32, #tpu.memory_space<smem>>, %arg2: memref<8x16xf32, #tpu.memory_space<vmem>>, %arg3: memref<48x16xbf16, #tpu.memory_space<vmem>>, %arg4: memref<1x16xf32, #tpu.memory_space<vmem>>, %arg5: memref<16x16xbf16, #tpu.memory_space<vmem>>, %arg6: memref<1x16xf32, #tpu.memory_space<vmem>>, %arg7: memref<1x16xf32, #tpu.memory_space<vmem>>, %arg8: memref<48x16xbf16, #tpu.memory_space<vmem>>, %arg9: memref<1x16xf32, #tpu.memory_space<vmem>>, %arg10: memref<48x16xbf16, #tpu.memory_space<vmem>>, %arg11: memref<1x16xf32, #tpu.memory_space<vmem>>, %arg12: memref<16x1xbf16, #tpu.memory_space<vmem>>, %arg13: memref<1x1xf32, #tpu.memory_space<vmem>>, %arg14: memref<16x16xbf16, #tpu.memory_space<vmem>>, %arg15: memref<1x16xf32, #tpu.memory_space<vmem>>, %arg16: memref<16x16xbf16, #tpu.memory_space<vmem>>, %arg17: memref<1x16xf32, #tpu.memory_space<vmem>>, %arg18: memref<2x48x16xbf16, #tpu.memory_space<vmem>>, %arg19: memref<2x1x16xf32, #tpu.memory_space<vmem>>, %arg20: memref<16x8xbf16, #tpu.memory_space<vmem>>, %arg21: memref<1x8xf32, #tpu.memory_space<vmem>>, %arg22: memref<24x8xf32, #tpu.memory_space<vmem>>, %arg23: memref<8x1xf32, #tpu.memory_space<vmem>>) attributes {dimension_semantics = [#tpu.dimension_semantics<parallel>], iteration_bounds = array<i64: 2>, scalar_prefetch = 1 : i64, scratch_operands = 0 : i64, tpu.core_type = #tpu.core_type<tc>, window_params = [{transform_indices = @transform_0, window_bounds = array<i64: 8, 16>}, {pipeline_mode = #tpu.pipeline_mode<synchronous>, transform_indices = @transform_1, window_bounds = array<i64: 48, 16>}, {pipeline_mode = #tpu.pipeline_mode<synchronous>, transform_indices = @transform_2, window_bounds = array<i64: 1, 16>}, {pipeline_mode = #tpu.pipeline_mode<synchronous>, transform_indices = @transform_3, window_bounds = array<i64: 16, 16>}, {pipeline_mode = #tpu.pipeline_mode<synchronous>, transform_indices = @transform_4, window_bounds = array<i64: 1, 16>}, {pipeline_mode = #tpu.pipeline_mode<synchronous>, transform_indices = @transform_5, window_bounds = array<i64: 1, 16>}, {pipeline_mode = #tpu.pipeline_mode<synchronous>, transform_indices = @transform_6, window_bounds = array<i64: 48, 16>}, {pipeline_mode = #tpu.pipeline_mode<synchronous>, transform_indices = @transform_7, window_bounds = array<i64: 1, 16>}, {pipeline_mode = #tpu.pipeline_mode<synchronous>, transform_indices = @transform_8, window_bounds = array<i64: 48, 16>}, {pipeline_mode = #tpu.pipeline_mode<synchronous>, transform_indices = @transform_9, window_bounds = array<i64: 1, 16>}, {pipeline_mode = #tpu.pipeline_mode<synchronous>, transform_indices = @transform_10, window_bounds = array<i64: 16, 1>}, {pipeline_mode = #tpu.pipeline_mode<synchronous>, transform_indices = @transform_11, window_bounds = array<i64: 1, 1>}, {pipeline_mode = #tpu.pipeline_mode<synchronous>, transform_indices = @transform_12, window_bounds = array<i64: 16, 16>}, {pipeline_mode = #tpu.pipeline_mode<synchronous>, transform_indices = @transform_13, window_bounds = array<i64: 1, 16>}, {pipeline_mode = #tpu.pipeline_mode<synchronous>, transform_indices = @transform_14, window_bounds = array<i64: 16, 16>}, {pipeline_mode = #tpu.pipeline_mode<synchronous>, transform_indices = @transform_15, window_bounds = array<i64: 1, 16>}, {pipeline_mode = #tpu.pipeline_mode<synchronous>, transform_indices = @transform_16, window_bounds = array<i64: 2, 48, 16>}, {pipeline_mode = #tpu.pipeline_mode<synchronous>, transform_indices = @transform_17, window_bounds = array<i64: 2, 1, 16>}, {pipeline_mode = #tpu.pipeline_mode<synchronous>, transform_indices = @transform_18, window_bounds = array<i64: 16, 8>}, {pipeline_mode = #tpu.pipeline_mode<synchronous>, transform_indices = @transform_19, window_bounds = array<i64: 1, 8>}, {transform_indices = @transform_20, window_bounds = array<i64: 24, 8>}, {transform_indices = @transform_21, window_bounds = array<i64: 8, 1>}]} {
    %0 = arith.index_cast %arg0 : i32 to index
    %1 = memref.load %arg1[%0] : memref<2xi32, #tpu.memory_space<smem>>
    %2 = tpu.iota {dimensions = array<i32: 0>} : vector<8x1xi32>
    %3 = vector.broadcast %1 : i32 to vector<8x1xi32>
    %4 = arith.cmpi slt, %2, %3 : vector<8x1xi32>
    %5 = arith.extui %4 : vector<8x1xi1> to vector<8x1xi32>
    %6 = arith.sitofp %5 : vector<8x1xi32> to vector<8x1xf32>
    %c0 = arith.constant 0 : index
    %c0_0 = arith.constant 0 : index
    %7 = vector.load %arg2[%c0, %c0_0] : memref<8x16xf32, #tpu.memory_space<vmem>>, vector<8x16xf32>
    %8 = vector.broadcast %6 : vector<8x1xf32> to vector<8x16xf32>
    %9 = arith.mulf %7, %8 : vector<8x16xf32>
    %c0_1 = arith.constant 0 : index
    %c0_2 = arith.constant 0 : index
    %10 = vector.load %arg3[%c0_1, %c0_2] : memref<48x16xbf16, #tpu.memory_space<vmem>>, vector<48x16xbf16>
    %c0_3 = arith.constant 0 : index
    %c0_4 = arith.constant 0 : index
    %11 = vector.load %arg4[%c0_3, %c0_4] : memref<1x16xf32, #tpu.memory_space<vmem>>, vector<1x16xf32>
    %12 = tpu.iota {dimensions = array<i32: 0>} : vector<8x1xi32>
    %c1_i32 = arith.constant 1 : i32
    %13 = vector.broadcast %c1_i32 : i32 to vector<8x1xi32>
    %14 = arith.cmpi sge, %12, %13 : vector<8x1xi32>
    %c1_i32_5 = arith.constant 1 : i32
    %15 = tpu.dynamic_rotate %9 by %c1_i32_5 dim 0 : vector<8x16xf32>, i32 -> vector<8x16xf32>
    %cst = arith.constant 0.000000e+00 : f32
    %16 = vector.shape_cast %14 : vector<8x1xi1> to vector<8x1xi1>
    %17 = vector.broadcast %16 : vector<8x1xi1> to vector<8x16xi1>
    %18 = vector.broadcast %cst : f32 to vector<8x16xf32>
    %19 = arith.select %17, %15, %18 : vector<8x16xi1>, vector<8x16xf32>
    %c6_i32 = arith.constant 6 : i32
    %20 = vector.broadcast %c6_i32 : i32 to vector<8x1xi32>
    %21 = arith.cmpi sle, %12, %20 : vector<8x1xi32>
    %c7_i32 = arith.constant 7 : i32
    %22 = tpu.dynamic_rotate %9 by %c7_i32 dim 0 : vector<8x16xf32>, i32 -> vector<8x16xf32>
    %cst_6 = arith.constant 0.000000e+00 : f32
    %23 = vector.shape_cast %21 : vector<8x1xi1> to vector<8x1xi1>
    %24 = vector.broadcast %23 : vector<8x1xi1> to vector<8x16xi1>
    %25 = vector.broadcast %cst_6 : f32 to vector<8x16xf32>
    %26 = arith.select %24, %22, %25 : vector<8x16xi1>, vector<8x16xf32>
    %27 = tpu.concatenate %19, %9, %26 in 1 : vector<8x16xf32>, vector<8x16xf32>, vector<8x16xf32> -> vector<8x48xf32>
    %28 = arith.truncf %27 : vector<8x48xf32> to vector<8x48xbf16>
    %cst_7 = arith.constant dense<0.000000e+00> : vector<8x16xf32>
    %29 = tpu.matmul %28, %10, %cst_7 {dimension_numbers = #tpu.dot_dimension_numbers<[1], [0], [0], [1], [0, 0, 1, 1], [], []>} : vector<8x48xbf16>, vector<48x16xbf16>, vector<8x16xf32> -> vector<8x16xf32>
    %30 = vector.broadcast %11 : vector<1x16xf32> to vector<8x16xf32>
    %31 = arith.addf %29, %30 : vector<8x16xf32>
    %cst_8 = arith.constant 0.000000e+00 : f32
    %32 = vector.broadcast %cst_8 : f32 to vector<8x16xf32>
    %33 = arith.maximumf %31, %32 : vector<8x16xf32>
    %34 = arith.truncf %33 : vector<8x16xf32> to vector<8x16xbf16>
    %c0_9 = arith.constant 0 : index
    %c0_10 = arith.constant 0 : index
    %35 = vector.load %arg5[%c0_9, %c0_10] : memref<16x16xbf16, #tpu.memory_space<vmem>>, vector<16x16xbf16>
    %cst_11 = arith.constant dense<0.000000e+00> : vector<8x16xf32>
    %36 = tpu.matmul %34, %35, %cst_11 {dimension_numbers = #tpu.dot_dimension_numbers<[1], [0], [0], [1], [0, 0, 1, 1], [], []>} : vector<8x16xbf16>, vector<16x16xbf16>, vector<8x16xf32> -> vector<8x16xf32>
    %c0_12 = arith.constant 0 : index
    %c0_13 = arith.constant 0 : index
    %37 = vector.load %arg6[%c0_12, %c0_13] : memref<1x16xf32, #tpu.memory_space<vmem>>, vector<1x16xf32>
    %38 = vector.broadcast %37 : vector<1x16xf32> to vector<8x16xf32>
    %39 = arith.addf %36, %38 : vector<8x16xf32>
    %40 = vector.broadcast %6 : vector<8x1xf32> to vector<8x16xf32>
    %41 = arith.mulf %39, %40 : vector<8x16xf32>
    %c0_14 = arith.constant 0 : index
    %c0_15 = arith.constant 0 : index
    %42 = vector.load %arg7[%c0_14, %c0_15] : memref<1x16xf32, #tpu.memory_space<vmem>>, vector<1x16xf32>
    %43 = vector.broadcast %42 : vector<1x16xf32> to vector<8x16xf32>
    %44 = arith.addf %41, %43 : vector<8x16xf32>
    %c0_16 = arith.constant 0 : index
    %c0_17 = arith.constant 0 : index
    %45 = vector.load %arg8[%c0_16, %c0_17] : memref<48x16xbf16, #tpu.memory_space<vmem>>, vector<48x16xbf16>
    %c0_18 = arith.constant 0 : index
    %c0_19 = arith.constant 0 : index
    %46 = vector.load %arg9[%c0_18, %c0_19] : memref<1x16xf32, #tpu.memory_space<vmem>>, vector<1x16xf32>
    %47 = tpu.iota {dimensions = array<i32: 0>} : vector<8x1xi32>
    %c1_i32_20 = arith.constant 1 : i32
    %48 = vector.broadcast %c1_i32_20 : i32 to vector<8x1xi32>
    %49 = arith.cmpi sge, %47, %48 : vector<8x1xi32>
    %c1_i32_21 = arith.constant 1 : i32
    %50 = tpu.dynamic_rotate %44 by %c1_i32_21 dim 0 : vector<8x16xf32>, i32 -> vector<8x16xf32>
    %cst_22 = arith.constant 0.000000e+00 : f32
    %51 = vector.shape_cast %49 : vector<8x1xi1> to vector<8x1xi1>
    %52 = vector.broadcast %51 : vector<8x1xi1> to vector<8x16xi1>
    %53 = vector.broadcast %cst_22 : f32 to vector<8x16xf32>
    %54 = arith.select %52, %50, %53 : vector<8x16xi1>, vector<8x16xf32>
    %c6_i32_23 = arith.constant 6 : i32
    %55 = vector.broadcast %c6_i32_23 : i32 to vector<8x1xi32>
    %56 = arith.cmpi sle, %47, %55 : vector<8x1xi32>
    %c7_i32_24 = arith.constant 7 : i32
    %57 = tpu.dynamic_rotate %44 by %c7_i32_24 dim 0 : vector<8x16xf32>, i32 -> vector<8x16xf32>
    %cst_25 = arith.constant 0.000000e+00 : f32
    %58 = vector.shape_cast %56 : vector<8x1xi1> to vector<8x1xi1>
    %59 = vector.broadcast %58 : vector<8x1xi1> to vector<8x16xi1>
    %60 = vector.broadcast %cst_25 : f32 to vector<8x16xf32>
    %61 = arith.select %59, %57, %60 : vector<8x16xi1>, vector<8x16xf32>
    %62 = tpu.concatenate %54, %44, %61 in 1 : vector<8x16xf32>, vector<8x16xf32>, vector<8x16xf32> -> vector<8x48xf32>
    %63 = arith.truncf %62 : vector<8x48xf32> to vector<8x48xbf16>
    %cst_26 = arith.constant dense<0.000000e+00> : vector<8x16xf32>
    %64 = tpu.matmul %63, %45, %cst_26 {dimension_numbers = #tpu.dot_dimension_numbers<[1], [0], [0], [1], [0, 0, 1, 1], [], []>} : vector<8x48xbf16>, vector<48x16xbf16>, vector<8x16xf32> -> vector<8x16xf32>
    %65 = vector.broadcast %46 : vector<1x16xf32> to vector<8x16xf32>
    %66 = arith.addf %64, %65 : vector<8x16xf32>
    %cst_27 = arith.constant 0.000000e+00 : f32
    %67 = vector.broadcast %cst_27 : f32 to vector<8x16xf32>
    %68 = arith.maximumf %66, %67 : vector<8x16xf32>
    %c0_28 = arith.constant 0 : index
    %c0_29 = arith.constant 0 : index
    %69 = vector.load %arg10[%c0_28, %c0_29] : memref<48x16xbf16, #tpu.memory_space<vmem>>, vector<48x16xbf16>
    %c0_30 = arith.constant 0 : index
    %c0_31 = arith.constant 0 : index
    %70 = vector.load %arg11[%c0_30, %c0_31] : memref<1x16xf32, #tpu.memory_space<vmem>>, vector<1x16xf32>
    %71 = tpu.iota {dimensions = array<i32: 0>} : vector<8x1xi32>
    %c1_i32_32 = arith.constant 1 : i32
    %72 = vector.broadcast %c1_i32_32 : i32 to vector<8x1xi32>
    %73 = arith.cmpi sge, %71, %72 : vector<8x1xi32>
    %c1_i32_33 = arith.constant 1 : i32
    %74 = tpu.dynamic_rotate %68 by %c1_i32_33 dim 0 : vector<8x16xf32>, i32 -> vector<8x16xf32>
    %cst_34 = arith.constant 0.000000e+00 : f32
    %75 = vector.shape_cast %73 : vector<8x1xi1> to vector<8x1xi1>
    %76 = vector.broadcast %75 : vector<8x1xi1> to vector<8x16xi1>
    %77 = vector.broadcast %cst_34 : f32 to vector<8x16xf32>
    %78 = arith.select %76, %74, %77 : vector<8x16xi1>, vector<8x16xf32>
    %c6_i32_35 = arith.constant 6 : i32
    %79 = vector.broadcast %c6_i32_35 : i32 to vector<8x1xi32>
    %80 = arith.cmpi sle, %71, %79 : vector<8x1xi32>
    %c7_i32_36 = arith.constant 7 : i32
    %81 = tpu.dynamic_rotate %68 by %c7_i32_36 dim 0 : vector<8x16xf32>, i32 -> vector<8x16xf32>
    %cst_37 = arith.constant 0.000000e+00 : f32
    %82 = vector.shape_cast %80 : vector<8x1xi1> to vector<8x1xi1>
    %83 = vector.broadcast %82 : vector<8x1xi1> to vector<8x16xi1>
    %84 = vector.broadcast %cst_37 : f32 to vector<8x16xf32>
    %85 = arith.select %83, %81, %84 : vector<8x16xi1>, vector<8x16xf32>
    %86 = tpu.concatenate %78, %68, %85 in 1 : vector<8x16xf32>, vector<8x16xf32>, vector<8x16xf32> -> vector<8x48xf32>
    %87 = arith.truncf %86 : vector<8x48xf32> to vector<8x48xbf16>
    %cst_38 = arith.constant dense<0.000000e+00> : vector<8x16xf32>
    %88 = tpu.matmul %87, %69, %cst_38 {dimension_numbers = #tpu.dot_dimension_numbers<[1], [0], [0], [1], [0, 0, 1, 1], [], []>} : vector<8x48xbf16>, vector<48x16xbf16>, vector<8x16xf32> -> vector<8x16xf32>
    %89 = vector.broadcast %70 : vector<1x16xf32> to vector<8x16xf32>
    %90 = arith.addf %88, %89 : vector<8x16xf32>
    %cst_39 = arith.constant 0.000000e+00 : f32
    %91 = vector.broadcast %cst_39 : f32 to vector<8x16xf32>
    %92 = arith.maximumf %90, %91 : vector<8x16xf32>
    %c0_40 = arith.constant 0 : index
    %c0_41 = arith.constant 0 : index
    %93 = vector.load %arg12[%c0_40, %c0_41] : memref<16x1xbf16, #tpu.memory_space<vmem>>, vector<16x1xbf16>
    %c0_42 = arith.constant 0 : index
    %c0_43 = arith.constant 0 : index
    %94 = vector.load %arg13[%c0_42, %c0_43] : memref<1x1xf32, #tpu.memory_space<vmem>>, vector<1x1xf32>
    %95 = arith.truncf %92 : vector<8x16xf32> to vector<8x16xbf16>
    %cst_44 = arith.constant dense<0.000000e+00> : vector<8x1xf32>
    %96 = tpu.matmul %95, %93, %cst_44 {dimension_numbers = #tpu.dot_dimension_numbers<[1], [0], [0], [1], [0, 0, 1, 1], [], []>} : vector<8x16xbf16>, vector<16x1xbf16>, vector<8x1xf32> -> vector<8x1xf32>
    %97 = vector.broadcast %94 : vector<1x1xf32> to vector<8x1xf32>
    %98 = arith.addf %96, %97 : vector<8x1xf32>
    %99 = math.absf %98 : vector<8x1xf32>
    %cst_45 = arith.constant 0.000000e+00 : f32
    %100 = vector.broadcast %cst_45 : f32 to vector<8x1xf32>
    %101 = arith.subf %100, %99 : vector<8x1xf32>
    %102 = math.exp %101 : vector<8x1xf32>
    %cst_46 = arith.constant 1.000000e+00 : f32
    %103 = vector.broadcast %cst_46 : f32 to vector<8x1xf32>
    %104 = arith.addf %103, %102 : vector<8x1xf32>
    %105 = math.log %104 : vector<8x1xf32>
    %cst_47 = arith.constant 0.000000e+00 : f32
    %106 = vector.broadcast %cst_47 : f32 to vector<8x1xf32>
    %107 = arith.maximumf %98, %106 : vector<8x1xf32>
    %108 = arith.addf %105, %107 : vector<8x1xf32>
    %109 = arith.mulf %108, %6 : vector<8x1xf32>
    %c0_48 = arith.constant 0 : index
    %c0_49 = arith.constant 0 : index
    %110 = vector.load %arg14[%c0_48, %c0_49] : memref<16x16xbf16, #tpu.memory_space<vmem>>, vector<16x16xbf16>
    %c0_50 = arith.constant 0 : index
    %c0_51 = arith.constant 0 : index
    %111 = vector.load %arg15[%c0_50, %c0_51] : memref<1x16xf32, #tpu.memory_space<vmem>>, vector<1x16xf32>
    %112 = arith.truncf %92 : vector<8x16xf32> to vector<8x16xbf16>
    %cst_52 = arith.constant dense<0.000000e+00> : vector<8x16xf32>
    %113 = tpu.matmul %112, %110, %cst_52 {dimension_numbers = #tpu.dot_dimension_numbers<[1], [0], [0], [1], [0, 0, 1, 1], [], []>} : vector<8x16xbf16>, vector<16x16xbf16>, vector<8x16xf32> -> vector<8x16xf32>
    %114 = vector.broadcast %111 : vector<1x16xf32> to vector<8x16xf32>
    %115 = arith.addf %113, %114 : vector<8x16xf32>
    %116 = tpu.iota {dimensions = array<i32: 0>} : vector<8x8xi32>
    %117 = tpu.iota {dimensions = array<i32: 1>} : vector<8x8xi32>
    %118 = arith.cmpi sle, %116, %117 : vector<8x8xi32>
    %119 = arith.extui %118 : vector<8x8xi1> to vector<8x8xi32>
    %120 = arith.sitofp %119 : vector<8x8xi32> to vector<8x8xf32>
    %121 = arith.cmpi eq, %116, %117 : vector<8x8xi32>
    %122 = arith.extui %121 : vector<8x8xi1> to vector<8x8xi32>
    %123 = arith.sitofp %122 : vector<8x8xi32> to vector<8x8xf32>
    %cst_53 = arith.constant 5.000000e-01 : f32
    %124 = vector.broadcast %cst_53 : f32 to vector<8x8xf32>
    %125 = arith.mulf %124, %123 : vector<8x8xf32>
    %126 = arith.subf %120, %125 : vector<8x8xf32>
    %cst_54 = arith.constant 1.000000e+00 : f32
    %127 = vector.broadcast %cst_54 : f32 to vector<1x8xf32>
    %128 = vector.broadcast %109 : vector<8x1xf32> to vector<8x8xf32>
    %129 = arith.mulf %126, %128 : vector<8x8xf32>
    %cst_55 = arith.constant dense<0.000000e+00> : vector<1x8xf32>
    %130 = tpu.matmul %127, %129, %cst_55 {dimension_numbers = #tpu.dot_dimension_numbers<[1], [0], [0], [1], [0, 0, 1, 1], [], []>} : vector<1x8xf32>, vector<8x8xf32>, vector<1x8xf32> -> vector<1x8xf32>
    %cst_56 = arith.constant dense<0.000000e+00> : vector<1x1xf32>
    %131 = tpu.matmul %127, %109, %cst_56 {dimension_numbers = #tpu.dot_dimension_numbers<[1], [0], [0], [1], [0, 0, 1, 1], [], []>} : vector<1x8xf32>, vector<8x1xf32>, vector<1x1xf32> -> vector<1x1xf32>
    %132 = tpu.iota {dimensions = array<i32: 0>} : vector<24x1xi32>
    %133 = arith.sitofp %132 : vector<24x1xi32> to vector<24x1xf32>
    %cst_57 = arith.constant 5.000000e-01 : f32
    %134 = vector.broadcast %cst_57 : f32 to vector<24x1xf32>
    %135 = arith.addf %133, %134 : vector<24x1xf32>
    %136 = vector.broadcast %135 : vector<24x1xf32> to vector<24x8xf32>
    %137 = vector.broadcast %130 : vector<1x8xf32> to vector<24x8xf32>
    %138 = arith.subf %136, %137 : vector<24x8xf32>
    %139 = arith.mulf %138, %138 : vector<24x8xf32>
    %cst_58 = arith.constant 0.000000e+00 : f32
    %140 = vector.broadcast %cst_58 : f32 to vector<24x8xf32>
    %141 = arith.subf %140, %139 : vector<24x8xf32>
    %142 = tpu.iota {dimensions = array<i32: 1>} : vector<24x8xi32>
    %143 = vector.broadcast %1 : i32 to vector<24x8xi32>
    %144 = arith.cmpi slt, %142, %143 : vector<24x8xi32>
    %cst_59 = arith.constant -1.000000e+09 : f32
    %145 = vector.broadcast %cst_59 : f32 to vector<24x8xf32>
    %146 = arith.select %144, %141, %145 : vector<24x8xi1>, vector<24x8xf32>
    %cst_60 = arith.constant dense<0xFF800000> : vector<24xf32>
    %147 = vector.multi_reduction <maximumf>, %146, %cst_60 [1] : vector<24x8xf32> to vector<24xf32>
    %148 = vector.shape_cast %147 : vector<24xf32> to vector<24x1xf32>
    %149 = vector.broadcast %148 : vector<24x1xf32> to vector<24x8xf32>
    %150 = arith.subf %146, %149 : vector<24x8xf32>
    %151 = math.exp %150 : vector<24x8xf32>
    %cst_61 = arith.constant dense<0.000000e+00> : vector<24xf32>
    %152 = vector.multi_reduction <add>, %151, %cst_61 [1] : vector<24x8xf32> to vector<24xf32>
    %153 = vector.shape_cast %152 : vector<24xf32> to vector<24x1xf32>
    %154 = tpu.reciprocal %153 {approx = true} : vector<24x1xf32> -> vector<24x1xf32>
    %155 = vector.broadcast %154 : vector<24x1xf32> to vector<24x8xf32>
    %156 = arith.mulf %151, %155 : vector<24x8xf32>
    %157 = arith.truncf %156 : vector<24x8xf32> to vector<24x8xbf16>
    %158 = arith.truncf %115 : vector<8x16xf32> to vector<8x16xbf16>
    %cst_62 = arith.constant dense<0.000000e+00> : vector<24x16xf32>
    %159 = tpu.matmul %157, %158, %cst_62 {dimension_numbers = #tpu.dot_dimension_numbers<[1], [0], [0], [1], [0, 0, 1, 1], [], []>} : vector<24x8xbf16>, vector<8x16xbf16>, vector<24x16xf32> -> vector<24x16xf32>
    %cst_63 = arith.constant 5.000000e-01 : f32
    %160 = vector.broadcast %cst_63 : f32 to vector<24x1xf32>
    %161 = arith.subf %135, %160 : vector<24x1xf32>
    %162 = vector.broadcast %131 : vector<1x1xf32> to vector<24x1xf32>
    %163 = arith.cmpf olt, %161, %162 : vector<24x1xf32>
    %164 = arith.extui %163 : vector<24x1xi1> to vector<24x1xi32>
    %165 = arith.sitofp %164 : vector<24x1xi32> to vector<24x1xf32>
    %166 = vector.broadcast %165 : vector<24x1xf32> to vector<24x16xf32>
    %167 = arith.mulf %159, %166 : vector<24x16xf32>
    %c0_64 = arith.constant 0 : index
    %c0_65 = arith.constant 0 : index
    %168 = vector.load %arg16[%c0_64, %c0_65] : memref<16x16xbf16, #tpu.memory_space<vmem>>, vector<16x16xbf16>
    %c0_66 = arith.constant 0 : index
    %c0_67 = arith.constant 0 : index
    %169 = vector.load %arg17[%c0_66, %c0_67] : memref<1x16xf32, #tpu.memory_space<vmem>>, vector<1x16xf32>
    %170 = arith.truncf %167 : vector<24x16xf32> to vector<24x16xbf16>
    %cst_68 = arith.constant dense<0.000000e+00> : vector<24x16xf32>
    %171 = tpu.matmul %170, %168, %cst_68 {dimension_numbers = #tpu.dot_dimension_numbers<[1], [0], [0], [1], [0, 0, 1, 1], [], []>} : vector<24x16xbf16>, vector<16x16xbf16>, vector<24x16xf32> -> vector<24x16xf32>
    %172 = vector.broadcast %169 : vector<1x16xf32> to vector<24x16xf32>
    %173 = arith.addf %171, %172 : vector<24x16xf32>
    %cst_69 = arith.constant 0.000000e+00 : f32
    %174 = vector.broadcast %cst_69 : f32 to vector<24x16xf32>
    %175 = arith.maximumf %173, %174 : vector<24x16xf32>
    %c0_70 = arith.constant 0 : index
    %c0_71 = arith.constant 0 : index
    %c0_72 = arith.constant 0 : index
    %176 = vector.load %arg18[%c0_70, %c0_71, %c0_72] : memref<2x48x16xbf16, #tpu.memory_space<vmem>>, vector<1x48x16xbf16>
    %177 = vector.shape_cast %176 : vector<1x48x16xbf16> to vector<48x16xbf16>
    %c0_73 = arith.constant 0 : index
    %c0_74 = arith.constant 0 : index
    %c0_75 = arith.constant 0 : index
    %178 = vector.load %arg19[%c0_73, %c0_74, %c0_75] : memref<2x1x16xf32, #tpu.memory_space<vmem>>, vector<1x1x16xf32>
    %179 = vector.shape_cast %178 : vector<1x1x16xf32> to vector<1x16xf32>
    %180 = tpu.iota {dimensions = array<i32: 0>} : vector<24x1xi32>
    %c1_i32_76 = arith.constant 1 : i32
    %181 = vector.broadcast %c1_i32_76 : i32 to vector<24x1xi32>
    %182 = arith.cmpi sge, %180, %181 : vector<24x1xi32>
    %c1_i32_77 = arith.constant 1 : i32
    %183 = tpu.dynamic_rotate %175 by %c1_i32_77 dim 0 : vector<24x16xf32>, i32 -> vector<24x16xf32>
    %cst_78 = arith.constant 0.000000e+00 : f32
    %184 = vector.shape_cast %182 : vector<24x1xi1> to vector<24x1xi1>
    %185 = vector.broadcast %184 : vector<24x1xi1> to vector<24x16xi1>
    %186 = vector.broadcast %cst_78 : f32 to vector<24x16xf32>
    %187 = arith.select %185, %183, %186 : vector<24x16xi1>, vector<24x16xf32>
    %c22_i32 = arith.constant 22 : i32
    %188 = vector.broadcast %c22_i32 : i32 to vector<24x1xi32>
    %189 = arith.cmpi sle, %180, %188 : vector<24x1xi32>
    %c23_i32 = arith.constant 23 : i32
    %190 = tpu.dynamic_rotate %175 by %c23_i32 dim 0 : vector<24x16xf32>, i32 -> vector<24x16xf32>
    %cst_79 = arith.constant 0.000000e+00 : f32
    %191 = vector.shape_cast %189 : vector<24x1xi1> to vector<24x1xi1>
    %192 = vector.broadcast %191 : vector<24x1xi1> to vector<24x16xi1>
    %193 = vector.broadcast %cst_79 : f32 to vector<24x16xf32>
    %194 = arith.select %192, %190, %193 : vector<24x16xi1>, vector<24x16xf32>
    %195 = tpu.concatenate %187, %175, %194 in 1 : vector<24x16xf32>, vector<24x16xf32>, vector<24x16xf32> -> vector<24x48xf32>
    %196 = arith.truncf %195 : vector<24x48xf32> to vector<24x48xbf16>
    %cst_80 = arith.constant dense<0.000000e+00> : vector<24x16xf32>
    %197 = tpu.matmul %196, %177, %cst_80 {dimension_numbers = #tpu.dot_dimension_numbers<[1], [0], [0], [1], [0, 0, 1, 1], [], []>} : vector<24x48xbf16>, vector<48x16xbf16>, vector<24x16xf32> -> vector<24x16xf32>
    %198 = vector.broadcast %179 : vector<1x16xf32> to vector<24x16xf32>
    %199 = arith.addf %197, %198 : vector<24x16xf32>
    %cst_81 = arith.constant 0.000000e+00 : f32
    %200 = vector.broadcast %cst_81 : f32 to vector<24x16xf32>
    %201 = arith.maximumf %199, %200 : vector<24x16xf32>
    %c1 = arith.constant 1 : index
    %c0_82 = arith.constant 0 : index
    %c0_83 = arith.constant 0 : index
    %202 = vector.load %arg18[%c1, %c0_82, %c0_83] : memref<2x48x16xbf16, #tpu.memory_space<vmem>>, vector<1x48x16xbf16>
    %203 = vector.shape_cast %202 : vector<1x48x16xbf16> to vector<48x16xbf16>
    %c1_84 = arith.constant 1 : index
    %c0_85 = arith.constant 0 : index
    %c0_86 = arith.constant 0 : index
    %204 = vector.load %arg19[%c1_84, %c0_85, %c0_86] : memref<2x1x16xf32, #tpu.memory_space<vmem>>, vector<1x1x16xf32>
    %205 = vector.shape_cast %204 : vector<1x1x16xf32> to vector<1x16xf32>
    %206 = tpu.iota {dimensions = array<i32: 0>} : vector<24x1xi32>
    %c1_i32_87 = arith.constant 1 : i32
    %207 = vector.broadcast %c1_i32_87 : i32 to vector<24x1xi32>
    %208 = arith.cmpi sge, %206, %207 : vector<24x1xi32>
    %c1_i32_88 = arith.constant 1 : i32
    %209 = tpu.dynamic_rotate %201 by %c1_i32_88 dim 0 : vector<24x16xf32>, i32 -> vector<24x16xf32>
    %cst_89 = arith.constant 0.000000e+00 : f32
    %210 = vector.shape_cast %208 : vector<24x1xi1> to vector<24x1xi1>
    %211 = vector.broadcast %210 : vector<24x1xi1> to vector<24x16xi1>
    %212 = vector.broadcast %cst_89 : f32 to vector<24x16xf32>
    %213 = arith.select %211, %209, %212 : vector<24x16xi1>, vector<24x16xf32>
    %c22_i32_90 = arith.constant 22 : i32
    %214 = vector.broadcast %c22_i32_90 : i32 to vector<24x1xi32>
    %215 = arith.cmpi sle, %206, %214 : vector<24x1xi32>
    %c23_i32_91 = arith.constant 23 : i32
    %216 = tpu.dynamic_rotate %201 by %c23_i32_91 dim 0 : vector<24x16xf32>, i32 -> vector<24x16xf32>
    %cst_92 = arith.constant 0.000000e+00 : f32
    %217 = vector.shape_cast %215 : vector<24x1xi1> to vector<24x1xi1>
    %218 = vector.broadcast %217 : vector<24x1xi1> to vector<24x16xi1>
    %219 = vector.broadcast %cst_92 : f32 to vector<24x16xf32>
    %220 = arith.select %218, %216, %219 : vector<24x16xi1>, vector<24x16xf32>
    %221 = tpu.concatenate %213, %201, %220 in 1 : vector<24x16xf32>, vector<24x16xf32>, vector<24x16xf32> -> vector<24x48xf32>
    %222 = arith.truncf %221 : vector<24x48xf32> to vector<24x48xbf16>
    %cst_93 = arith.constant dense<0.000000e+00> : vector<24x16xf32>
    %223 = tpu.matmul %222, %203, %cst_93 {dimension_numbers = #tpu.dot_dimension_numbers<[1], [0], [0], [1], [0, 0, 1, 1], [], []>} : vector<24x48xbf16>, vector<48x16xbf16>, vector<24x16xf32> -> vector<24x16xf32>
    %224 = vector.broadcast %205 : vector<1x16xf32> to vector<24x16xf32>
    %225 = arith.addf %223, %224 : vector<24x16xf32>
    %cst_94 = arith.constant 0.000000e+00 : f32
    %226 = vector.broadcast %cst_94 : f32 to vector<24x16xf32>
    %227 = arith.maximumf %225, %226 : vector<24x16xf32>
    %228 = arith.truncf %227 : vector<24x16xf32> to vector<24x16xbf16>
    %c0_95 = arith.constant 0 : index
    %c0_96 = arith.constant 0 : index
    %229 = vector.load %arg20[%c0_95, %c0_96] : memref<16x8xbf16, #tpu.memory_space<vmem>>, vector<16x8xbf16>
    %cst_97 = arith.constant dense<0.000000e+00> : vector<24x8xf32>
    %230 = tpu.matmul %228, %229, %cst_97 {dimension_numbers = #tpu.dot_dimension_numbers<[1], [0], [0], [1], [0, 0, 1, 1], [], []>} : vector<24x16xbf16>, vector<16x8xbf16>, vector<24x8xf32> -> vector<24x8xf32>
    %c0_98 = arith.constant 0 : index
    %c0_99 = arith.constant 0 : index
    %231 = vector.load %arg21[%c0_98, %c0_99] : memref<1x8xf32, #tpu.memory_space<vmem>>, vector<1x8xf32>
    %232 = vector.broadcast %231 : vector<1x8xf32> to vector<24x8xf32>
    %233 = arith.addf %230, %232 : vector<24x8xf32>
    %234 = vector.broadcast %165 : vector<24x1xf32> to vector<24x8xf32>
    %235 = arith.mulf %233, %234 : vector<24x8xf32>
    %c0_100 = arith.constant 0 : index
    %c0_101 = arith.constant 0 : index
    %236 = vector.load %arg22[%c0_100, %c0_101] : memref<24x8xf32, #tpu.memory_space<vmem>>, vector<24x8xf32>
    tpu.vector_store %arg22[%c0_100, %c0_101], %235 {strides = array<i32>} : memref<24x8xf32, #tpu.memory_space<vmem>>, vector<24x8xf32>,
    %c0_102 = arith.constant 0 : index
    %c0_103 = arith.constant 0 : index
    %237 = vector.load %arg23[%c0_102, %c0_103] : memref<8x1xf32, #tpu.memory_space<vmem>>, vector<8x1xf32>
    tpu.vector_store %arg23[%c0_102, %c0_103], %109 {strides = array<i32>} : memref<8x1xf32, #tpu.memory_space<vmem>>, vector<8x1xf32>,
    return
  }
  func.func @transform_0(%arg0: i32, %arg1: memref<2xi32, #tpu.memory_space<smem>>) -> (i32, i32) {
    %c0_i32 = arith.constant 0 : i32
    %c0_i32_0 = arith.constant 0 : i32
    return %arg0, %c0_i32 : i32, i32
  }
  func.func @transform_1(%arg0: i32, %arg1: memref<2xi32, #tpu.memory_space<smem>>) -> (i32, i32) {
    %c0_i32 = arith.constant 0 : i32
    %c0_i32_0 = arith.constant 0 : i32
    %c0_i32_1 = arith.constant 0 : i32
    return %c0_i32, %c0_i32_0 : i32, i32
  }
  func.func @transform_2(%arg0: i32, %arg1: memref<2xi32, #tpu.memory_space<smem>>) -> (i32, i32) {
    %c0_i32 = arith.constant 0 : i32
    %c0_i32_0 = arith.constant 0 : i32
    %c0_i32_1 = arith.constant 0 : i32
    return %c0_i32, %c0_i32_0 : i32, i32
  }
  func.func @transform_3(%arg0: i32, %arg1: memref<2xi32, #tpu.memory_space<smem>>) -> (i32, i32) {
    %c0_i32 = arith.constant 0 : i32
    %c0_i32_0 = arith.constant 0 : i32
    %c0_i32_1 = arith.constant 0 : i32
    return %c0_i32, %c0_i32_0 : i32, i32
  }
  func.func @transform_4(%arg0: i32, %arg1: memref<2xi32, #tpu.memory_space<smem>>) -> (i32, i32) {
    %c0_i32 = arith.constant 0 : i32
    %c0_i32_0 = arith.constant 0 : i32
    %c0_i32_1 = arith.constant 0 : i32
    return %c0_i32, %c0_i32_0 : i32, i32
  }
  func.func @transform_5(%arg0: i32, %arg1: memref<2xi32, #tpu.memory_space<smem>>) -> (i32, i32) {
    %c0_i32 = arith.constant 0 : i32
    %c0_i32_0 = arith.constant 0 : i32
    %c0_i32_1 = arith.constant 0 : i32
    return %c0_i32, %c0_i32_0 : i32, i32
  }
  func.func @transform_6(%arg0: i32, %arg1: memref<2xi32, #tpu.memory_space<smem>>) -> (i32, i32) {
    %c0_i32 = arith.constant 0 : i32
    %c0_i32_0 = arith.constant 0 : i32
    %c0_i32_1 = arith.constant 0 : i32
    return %c0_i32, %c0_i32_0 : i32, i32
  }
  func.func @transform_7(%arg0: i32, %arg1: memref<2xi32, #tpu.memory_space<smem>>) -> (i32, i32) {
    %c0_i32 = arith.constant 0 : i32
    %c0_i32_0 = arith.constant 0 : i32
    %c0_i32_1 = arith.constant 0 : i32
    return %c0_i32, %c0_i32_0 : i32, i32
  }
  func.func @transform_8(%arg0: i32, %arg1: memref<2xi32, #tpu.memory_space<smem>>) -> (i32, i32) {
    %c0_i32 = arith.constant 0 : i32
    %c0_i32_0 = arith.constant 0 : i32
    %c0_i32_1 = arith.constant 0 : i32
    return %c0_i32, %c0_i32_0 : i32, i32
  }
  func.func @transform_9(%arg0: i32, %arg1: memref<2xi32, #tpu.memory_space<smem>>) -> (i32, i32) {
    %c0_i32 = arith.constant 0 : i32
    %c0_i32_0 = arith.constant 0 : i32
    %c0_i32_1 = arith.constant 0 : i32
    return %c0_i32, %c0_i32_0 : i32, i32
  }
  func.func @transform_10(%arg0: i32, %arg1: memref<2xi32, #tpu.memory_space<smem>>) -> (i32, i32) {
    %c0_i32 = arith.constant 0 : i32
    %c0_i32_0 = arith.constant 0 : i32
    %c0_i32_1 = arith.constant 0 : i32
    return %c0_i32, %c0_i32_0 : i32, i32
  }
  func.func @transform_11(%arg0: i32, %arg1: memref<2xi32, #tpu.memory_space<smem>>) -> (i32, i32) {
    %c0_i32 = arith.constant 0 : i32
    %c0_i32_0 = arith.constant 0 : i32
    %c0_i32_1 = arith.constant 0 : i32
    return %c0_i32, %c0_i32_0 : i32, i32
  }
  func.func @transform_12(%arg0: i32, %arg1: memref<2xi32, #tpu.memory_space<smem>>) -> (i32, i32) {
    %c0_i32 = arith.constant 0 : i32
    %c0_i32_0 = arith.constant 0 : i32
    %c0_i32_1 = arith.constant 0 : i32
    return %c0_i32, %c0_i32_0 : i32, i32
  }
  func.func @transform_13(%arg0: i32, %arg1: memref<2xi32, #tpu.memory_space<smem>>) -> (i32, i32) {
    %c0_i32 = arith.constant 0 : i32
    %c0_i32_0 = arith.constant 0 : i32
    %c0_i32_1 = arith.constant 0 : i32
    return %c0_i32, %c0_i32_0 : i32, i32
  }
  func.func @transform_14(%arg0: i32, %arg1: memref<2xi32, #tpu.memory_space<smem>>) -> (i32, i32) {
    %c0_i32 = arith.constant 0 : i32
    %c0_i32_0 = arith.constant 0 : i32
    %c0_i32_1 = arith.constant 0 : i32
    return %c0_i32, %c0_i32_0 : i32, i32
  }
  func.func @transform_15(%arg0: i32, %arg1: memref<2xi32, #tpu.memory_space<smem>>) -> (i32, i32) {
    %c0_i32 = arith.constant 0 : i32
    %c0_i32_0 = arith.constant 0 : i32
    %c0_i32_1 = arith.constant 0 : i32
    return %c0_i32, %c0_i32_0 : i32, i32
  }
  func.func @transform_16(%arg0: i32, %arg1: memref<2xi32, #tpu.memory_space<smem>>) -> (i32, i32, i32) {
    %c0_i32 = arith.constant 0 : i32
    %c0_i32_0 = arith.constant 0 : i32
    %c0_i32_1 = arith.constant 0 : i32
    %c0_i32_2 = arith.constant 0 : i32
    return %c0_i32, %c0_i32_0, %c0_i32_1 : i32, i32, i32
  }
  func.func @transform_17(%arg0: i32, %arg1: memref<2xi32, #tpu.memory_space<smem>>) -> (i32, i32, i32) {
    %c0_i32 = arith.constant 0 : i32
    %c0_i32_0 = arith.constant 0 : i32
    %c0_i32_1 = arith.constant 0 : i32
    %c0_i32_2 = arith.constant 0 : i32
    return %c0_i32, %c0_i32_0, %c0_i32_1 : i32, i32, i32
  }
  func.func @transform_18(%arg0: i32, %arg1: memref<2xi32, #tpu.memory_space<smem>>) -> (i32, i32) {
    %c0_i32 = arith.constant 0 : i32
    %c0_i32_0 = arith.constant 0 : i32
    %c0_i32_1 = arith.constant 0 : i32
    return %c0_i32, %c0_i32_0 : i32, i32
  }
  func.func @transform_19(%arg0: i32, %arg1: memref<2xi32, #tpu.memory_space<smem>>) -> (i32, i32) {
    %c0_i32 = arith.constant 0 : i32
    %c0_i32_0 = arith.constant 0 : i32
    %c0_i32_1 = arith.constant 0 : i32
    return %c0_i32, %c0_i32_0 : i32, i32
  }
  func.func @transform_20(%arg0: i32, %arg1: memref<2xi32, #tpu.memory_space<smem>>) -> (i32, i32) {
    %c0_i32 = arith.constant 0 : i32
    %c0_i32_0 = arith.constant 0 : i32
    return %arg0, %c0_i32 : i32, i32
  }
  func.func @transform_21(%arg0: i32, %arg1: memref<2xi32, #tpu.memory_space<smem>>) -> (i32, i32) {
    %c0_i32 = arith.constant 0 : i32
    %c0_i32_0 = arith.constant 0 : i32
    return %arg0, %c0_i32 : i32, i32
  }
}

</mosaic_0001>

<llo_original>
// kernel: parallel_tacotron2_forward.1
$region0: #{parallel_tacotron2_forward.1}
  #allocation0 [shape = 'u32[]', space=smem, size = 0x4, offset = 0x4, fixed_abs, tag = 'smem constant byte address 0x4 - core index']
  #allocation1 [shape = 'u32[144,128]{1,0:T(1,128)}', space=vmem, size = 0x12000, scoped, tag = 'internal scratch']
  #allocation2 [shape = 's32[1]{0}', space=sflag, size = 0x4, scoped, tag = 'scoped memory for parallel_tacotron2_forward.1']
  #allocation3 [shape = 'u8[512]{0}', space=smem, size = 0x200, scoped, tag = 'prefetched SMEM operand 0']
  #allocation4 [shape = 'f32[1,1]{1,0:T(1,128)S(1)}', space=vmem, size = 0x200, scoped, tag = 'scoped memory for parallel_tacotron2_forward.1']
  %s0 = inlined_call_operand.vmem [shape: s32[2], index: 0, kind: input, shape index: {}]
  %s1 = inlined_call_operand.vmem [shape: f32[16,16], index: 1, kind: input, shape index: {}]
  %s2 = inlined_call_operand.vmem [shape: bf16[48,16], index: 2, kind: input, shape index: {}]
  %s3 = inlined_call_operand.vmem [shape: f32[1,16], index: 3, kind: input, shape index: {}]
  %s4 = inlined_call_operand.vmem [shape: bf16[16,16], index: 4, kind: input, shape index: {}]
  %s5 = inlined_call_operand.vmem [shape: f32[1,16], index: 5, kind: input, shape index: {}]
  %s6 = inlined_call_operand.vmem [shape: f32[1,16], index: 6, kind: input, shape index: {}]
  %s7 = inlined_call_operand.vmem [shape: bf16[48,16], index: 7, kind: input, shape index: {}]
  %s8 = inlined_call_operand.vmem [shape: f32[1,16], index: 8, kind: input, shape index: {}]
  %s9 = inlined_call_operand.vmem [shape: bf16[48,16], index: 9, kind: input, shape index: {}]
  %s10 = inlined_call_operand.vmem [shape: f32[1,16], index: 10, kind: input, shape index: {}]
  %s11 = inlined_call_operand.vmem [shape: bf16[16,1], index: 11, kind: input, shape index: {}]
  %s12 = inlined_call_operand.<no memory space> [shape: f32[1,1], index: 12, kind: input, shape index: {}]
  %s13 = inlined_call_operand.vmem [shape: bf16[16,16], index: 13, kind: input, shape index: {}]
  %s14 = inlined_call_operand.vmem [shape: f32[1,16], index: 14, kind: input, shape index: {}]
  %s15 = inlined_call_operand.vmem [shape: bf16[16,16], index: 15, kind: input, shape index: {}]
  %s16 = inlined_call_operand.vmem [shape: f32[1,16], index: 16, kind: input, shape index: {}]
  %s17 = inlined_call_operand.vmem [shape: bf16[2,48,16], index: 17, kind: input, shape index: {}]
  %s18 = inlined_call_operand.vmem [shape: f32[2,1,16], index: 18, kind: input, shape index: {}]
  %s19 = inlined_call_operand.vmem [shape: bf16[16,8], index: 19, kind: input, shape index: {}]
  %s20 = inlined_call_operand.vmem [shape: f32[1,8], index: 20, kind: input, shape index: {}]
  %s21 = inlined_call_operand.vmem [shape: f32[48,8], index: 21, kind: output, shape index: {0}]
  %s22 = inlined_call_operand.vmem [shape: f32[16,1], index: 22, kind: output, shape index: {1}]
  %23 = xla_tuple %s21, %s22
  %s24 = sld [smem:[#allocation0]]
  $region121: #{parallel_tacotron2_forward.1} parent=0
    _
  %s26 = ssub.s32 1, %s24
  %s27 = scalar_select 0, %s26, %s24
  %s28 = sshll.u32 %s0, 4
  %s29 = int_to_ptr.vmem [resolvable:$true] %s28
  %31 = dma.vmem_to_smem %s29, 16, [#allocation3], [#allocation2]
  %v32 = vstv %s12
  %33 = vst [vmem:[#allocation4] sm:$0x1] %v32
  %34 = dma.done [#allocation2], 16
  %35 = sfence
  loop: start=0, step=1, limit=4
  $region2: #{parallel_tacotron2_forward.1} parent=0 // loop_pre_header
    _
  $region3: #{parallel_tacotron2_forward.1} parent=0 // loop_header
    %s37 = sphi 0, %s41
    %p38 = scmp.ge.s32.totalorder %s37, 4
    %s47 = sphi 0, %s49
    %s50 = sphi 0, %s47
    %s51 = sphi 0, %s50
    %s67 = sphi 0, %s51
    %s71 = sphi 0, %s71
    %s73 = sphi 0, %s71
    %s74 = sphi 0, %s73
    %s88 = sphi 0, %s74
    %s92 = sphi 0, %s92
    %s94 = sphi 0, %s92
    %s95 = sphi 0, %s94
    %s109 = sphi 0, %s95
    %s113 = sphi 0, %s113
    %s115 = sphi 0, %s113
    %s116 = sphi 0, %s115
    %s130 = sphi 0, %s116
    %s134 = sphi 0, %s134
    %s136 = sphi 0, %s134
    %s137 = sphi 0, %s136
    %s151 = sphi 0, %s137
    %s155 = sphi 0, %s155
    %s157 = sphi 0, %s155
    %s158 = sphi 0, %s157
    %s172 = sphi 0, %s158
    %s176 = sphi 0, %s176
    %s178 = sphi 0, %s176
    %s179 = sphi 0, %s178
    %s193 = sphi 0, %s179
    %s197 = sphi 0, %s197
    %s199 = sphi 0, %s197
    %s200 = sphi 0, %s199
    %s214 = sphi 0, %s200
    %s218 = sphi 0, %s218
    %s220 = sphi 0, %s218
    %s221 = sphi 0, %s220
    %s235 = sphi 0, %s221
    %s239 = sphi 0, %s239
    %s241 = sphi 0, %s239
    %s242 = sphi 0, %s241
    %s256 = sphi 0, %s242
    %s260 = sphi 0, %s260
    %s262 = sphi 0, %s260
    %s263 = sphi 0, %s262
    %s277 = sphi 0, %s263
    %s281 = sphi 0, %s281
    %s283 = sphi 0, %s281
    %s284 = sphi 0, %s283
    %s298 = sphi 0, %s284
    %s302 = sphi 0, %s302
    %s304 = sphi 0, %s302
    %s305 = sphi 0, %s304
    %s319 = sphi 0, %s305
    %s323 = sphi 0, %s323
    %s325 = sphi 0, %s323
    %s326 = sphi 0, %s325
    %s340 = sphi 0, %s326
    %s344 = sphi 0, %s344
    %s346 = sphi 0, %s344
    %s347 = sphi 0, %s346
    %s361 = sphi 0, %s347
    %s365 = sphi 0, %s365
    %s367 = sphi 0, %s365
    %s368 = sphi 0, %s367
    %s382 = sphi 0, %s368
    %s386 = sphi 0, %s386
    %s388 = sphi 0, %s386
    %s389 = sphi 0, %s388
    %s403 = sphi 0, %s389
    %s407 = sphi 0, %s407
    %s409 = sphi 0, %s407
    %s410 = sphi 0, %s409
    %s424 = sphi 0, %s410
    %s428 = sphi 0, %s428
    %s430 = sphi 0, %s428
    %s431 = sphi 0, %s430
    %s445 = sphi 0, %s431
    %s449 = sphi 0, %s449
    %s451 = sphi 0, %s449
    %s452 = sphi 0, %s451
    %s466 = sphi 0, %s452
    %s472 = sphi 0, %s474
    %s475 = sphi 0, %s472
    %s476 = sphi 0, %s475
    %s492 = sphi 0, %s476
    %s498 = sphi 0, %s500
    %s501 = sphi 0, %s498
    %s502 = sphi 0, %s501
    %s518 = sphi 0, %s502
  $region4: #{parallel_tacotron2_forward.1} parent=0 // loop_header_branch
    %40 = sbr.rel (%p38) target = $region8
  $region5: #{parallel_tacotron2_forward.1} parent=0 // loop_body
    %s42 = ssub.s32 %s37, 1
    %s43 = ssub.s32 %s37, 2
    %s44 = sadd.s32 %s37, 1
    %s45 = ssub.s32 %s37, %s44
    %p46 = scmp.eq.s32.totalorder %s45, 0
    %s48 = sadd.s32 %s47, 1
    %s49 = scalar_select %p46, %s47, %s48
    %p52 = pneg %p46
    %p53 = scmp.eq.s32.totalorder %s37, 1
    %p54 = por %p52, %p53
    %p55 = scmp.ne.s32.totalorder %s47, %s50
    %p56 = scmp.eq.s32.totalorder %s37, 0
    %p57 = por %p55, %p56
    %p58 = scmp.ne.s32.totalorder %s47, %s50
    %p59 = scmp.eq.s32.totalorder %s42, 1
    %p60 = por %p58, %p59
    %p61 = scmp.ne.s32.totalorder %s50, %s51
    %p62 = scmp.eq.s32.totalorder %s42, 0
    %p63 = por %p61, %p62
    %p64 = scmp.ne.s32.totalorder %s50, %s51
    %p65 = scmp.eq.s32.totalorder %s43, 1
    %p66 = por %p64, %p65
    %p68 = scmp.ne.s32.totalorder %s51, %s67
    %p69 = scmp.eq.s32.totalorder %s43, 0
    %p70 = por %p68, %p69
    %s72 = sadd.s32 %s71, 1
    %p75 = scmp.eq.s32.totalorder %s37, 1
    %p76 = scmp.ne.s32.totalorder %s71, %s73
    %p77 = scmp.eq.s32.totalorder %s37, 0
    %p78 = por %p76, %p77
    %p79 = scmp.ne.s32.totalorder %s71, %s73
    %p80 = scmp.eq.s32.totalorder %s42, 1
    %p81 = por %p79, %p80
    %p82 = scmp.ne.s32.totalorder %s73, %s74
    %p83 = scmp.eq.s32.totalorder %s42, 0
    %p84 = por %p82, %p83
    %p85 = scmp.ne.s32.totalorder %s73, %s74
    %p86 = scmp.eq.s32.totalorder %s43, 1
    %p87 = por %p85, %p86
    %p89 = scmp.ne.s32.totalorder %s74, %s88
    %p90 = scmp.eq.s32.totalorder %s43, 0
    %p91 = por %p89, %p90
    %s93 = sadd.s32 %s92, 1
    %p96 = scmp.eq.s32.totalorder %s37, 1
    %p97 = scmp.ne.s32.totalorder %s92, %s94
    %p98 = scmp.eq.s32.totalorder %s37, 0
    %p99 = por %p97, %p98
    %p100 = scmp.ne.s32.totalorder %s92, %s94
    %p101 = scmp.eq.s32.totalorder %s42, 1
    %p102 = por %p100, %p101
    %p103 = scmp.ne.s32.totalorder %s94, %s95
    %p104 = scmp.eq.s32.totalorder %s42, 0
    %p105 = por %p103, %p104
    %p106 = scmp.ne.s32.totalorder %s94, %s95
    %p107 = scmp.eq.s32.totalorder %s43, 1
    %p108 = por %p106, %p107
    %p110 = scmp.ne.s32.totalorder %s95, %s109
    %p111 = scmp.eq.s32.totalorder %s43, 0
    %p112 = por %p110, %p111
    %s114 = sadd.s32 %s113, 1
    %p117 = scmp.eq.s32.totalorder %s37, 1
    %p118 = scmp.ne.s32.totalorder %s113, %s115
    %p119 = scmp.eq.s32.totalorder %s37, 0
    %p120 = por %p118, %p119
    %p121 = scmp.ne.s32.totalorder %s113, %s115
    %p122 = scmp.eq.s32.totalorder %s42, 1
    %p123 = por %p121, %p122
    %p124 = scmp.ne.s32.totalorder %s115, %s116
    %p125 = scmp.eq.s32.totalorder %s42, 0
    %p126 = por %p124, %p125
    %p127 = scmp.ne.s32.totalorder %s115, %s116
    %p128 = scmp.eq.s32.totalorder %s43, 1
    %p129 = por %p127, %p128
    %p131 = scmp.ne.s32.totalorder %s116, %s130
    %p132 = scmp.eq.s32.totalorder %s43, 0
    %p133 = por %p131, %p132
    %s135 = sadd.s32 %s134, 1
    %p138 = scmp.eq.s32.totalorder %s37, 1
    %p139 = scmp.ne.s32.totalorder %s134, %s136
    %p140 = scmp.eq.s32.totalorder %s37, 0
    %p141 = por %p139, %p140
    %p142 = scmp.ne.s32.totalorder %s134, %s136
    %p143 = scmp.eq.s32.totalorder %s42, 1
    %p144 = por %p142, %p143
    %p145 = scmp.ne.s32.totalorder %s136, %s137
    %p146 = scmp.eq.s32.totalorder %s42, 0
    %p147 = por %p145, %p146
    %p148 = scmp.ne.s32.totalorder %s136, %s137
    %p149 = scmp.eq.s32.totalorder %s43, 1
    %p150 = por %p148, %p149
    %p152 = scmp.ne.s32.totalorder %s137, %s151
    %p153 = scmp.eq.s32.totalorder %s43, 0
    %p154 = por %p152, %p153
    %s156 = sadd.s32 %s155, 1
    %p159 = scmp.eq.s32.totalorder %s37, 1
    %p160 = scmp.ne.s32.totalorder %s155, %s157
    %p161 = scmp.eq.s32.totalorder %s37, 0
    %p162 = por %p160, %p161
    %p163 = scmp.ne.s32.totalorder %s155, %s157
    %p164 = scmp.eq.s32.totalorder %s42, 1
    %p165 = por %p163, %p164
    %p166 = scmp.ne.s32.totalorder %s157, %s158
    %p167 = scmp.eq.s32.totalorder %s42, 0
    %p168 = por %p166, %p167
    %p169 = scmp.ne.s32.totalorder %s157, %s158
    %p170 = scmp.eq.s32.totalorder %s43, 1
    %p171 = por %p169, %p170
    %p173 = scmp.ne.s32.totalorder %s158, %s172
    %p174 = scmp.eq.s32.totalorder %s43, 0
    %p175 = por %p173, %p174
    %s177 = sadd.s32 %s176, 1
    %p180 = scmp.eq.s32.totalorder %s37, 1
    %p181 = scmp.ne.s32.totalorder %s176, %s178
    %p182 = scmp.eq.s32.totalorder %s37, 0
    %p183 = por %p181, %p182
    %p184 = scmp.ne.s32.totalorder %s176, %s178
    %p185 = scmp.eq.s32.totalorder %s42, 1
    %p186 = por %p184, %p185
    %p187 = scmp.ne.s32.totalorder %s178, %s179
    %p188 = scmp.eq.s32.totalorder %s42, 0
    %p189 = por %p187, %p188
    %p190 = scmp.ne.s32.totalorder %s178, %s179
    %p191 = scmp.eq.s32.totalorder %s43, 1
    %p192 = por %p190, %p191
    %p194 = scmp.ne.s32.totalorder %s179, %s193
    %p195 = scmp.eq.s32.totalorder %s43, 0
    %p196 = por %p194, %p195
    %s198 = sadd.s32 %s197, 1
    %p201 = scmp.eq.s32.totalorder %s37, 1
    %p202 = scmp.ne.s32.totalorder %s197, %s199
    %p203 = scmp.eq.s32.totalorder %s37, 0
    %p204 = por %p202, %p203
    %p205 = scmp.ne.s32.totalorder %s197, %s199
    %p206 = scmp.eq.s32.totalorder %s42, 1
    %p207 = por %p205, %p206
    %p208 = scmp.ne.s32.totalorder %s199, %s200
    %p209 = scmp.eq.s32.totalorder %s42, 0
    %p210 = por %p208, %p209
    %p211 = scmp.ne.s32.totalorder %s199, %s200
    %p212 = scmp.eq.s32.totalorder %s43, 1
    %p213 = por %p211, %p212
    %p215 = scmp.ne.s32.totalorder %s200, %s214
    %p216 = scmp.eq.s32.totalorder %s43, 0
    %p217 = por %p215, %p216
    %s219 = sadd.s32 %s218, 1
    %p222 = scmp.eq.s32.totalorder %s37, 1
    %p223 = scmp.ne.s32.totalorder %s218, %s220
    %p224 = scmp.eq.s32.totalorder %s37, 0
    %p225 = por %p223, %p224
    %p226 = scmp.ne.s32.totalorder %s218, %s220
    %p227 = scmp.eq.s32.totalorder %s42, 1
    %p228 = por %p226, %p227
    %p229 = scmp.ne.s32.totalorder %s220, %s221
    %p230 = scmp.eq.s32.totalorder %s42, 0
    %p231 = por %p229, %p230
    %p232 = scmp.ne.s32.totalorder %s220, %s221
    %p233 = scmp.eq.s32.totalorder %s43, 1
    %p234 = por %p232, %p233
    %p236 = scmp.ne.s32.totalorder %s221, %s235
    %p237 = scmp.eq.s32.totalorder %s43, 0
    %p238 = por %p236, %p237
    %s240 = sadd.s32 %s239, 1
    %p243 = scmp.eq.s32.totalorder %s37, 1
    %p244 = scmp.ne.s32.totalorder %s239, %s241
    %p245 = scmp.eq.s32.totalorder %s37, 0
    %p246 = por %p244, %p245
    %p247 = scmp.ne.s32.totalorder %s239, %s241
    %p248 = scmp.eq.s32.totalorder %s42, 1
    %p249 = por %p247, %p248
    %p250 = scmp.ne.s32.totalorder %s241, %s242
    %p251 = scmp.eq.s32.totalorder %s42, 0
    %p252 = por %p250, %p251
    %p253 = scmp.ne.s32.totalorder %s241, %s242
    %p254 = scmp.eq.s32.totalorder %s43, 1
    %p255 = por %p253, %p254
    %p257 = scmp.ne.s32.totalorder %s242, %s256
    %p258 = scmp.eq.s32.totalorder %s43, 0
    %p259 = por %p257, %p258
    %s261 = sadd.s32 %s260, 1
    %p264 = scmp.eq.s32.totalorder %s37, 1
    %p265 = scmp.ne.s32.totalorder %s260, %s262
    %p266 = scmp.eq.s32.totalorder %s37, 0
    %p267 = por %p265, %p266
    %p268 = scmp.ne.s32.totalorder %s260, %s262
    %p269 = scmp.eq.s32.totalorder %s42, 1
    %p270 = por %p268, %p269
    %p271 = scmp.ne.s32.totalorder %s262, %s263
    %p272 = scmp.eq.s32.totalorder %s42, 0
    %p273 = por %p271, %p272
    %p274 = scmp.ne.s32.totalorder %s262, %s263
    %p275 = scmp.eq.s32.totalorder %s43, 1
    %p276 = por %p274, %p275
    %p278 = scmp.ne.s32.totalorder %s263, %s277
    %p279 = scmp.eq.s32.totalorder %s43, 0
    %p280 = por %p278, %p279
    %s282 = sadd.s32 %s281, 1
    %p285 = scmp.eq.s32.totalorder %s37, 1
    %p286 = scmp.ne.s32.totalorder %s281, %s283
    %p287 = scmp.eq.s32.totalorder %s37, 0
    %p288 = por %p286, %p287
    %p289 = scmp.ne.s32.totalorder %s281, %s283
    %p290 = scmp.eq.s32.totalorder %s42, 1
    %p291 = por %p289, %p290
    %p292 = scmp.ne.s32.totalorder %s283, %s284
    %p293 = scmp.eq.s32.totalorder %s42, 0
    %p294 = por %p292, %p293
    %p295 = scmp.ne.s32.totalorder %s283, %s284
    %p296 = scmp.eq.s32.totalorder %s43, 1
    %p297 = por %p295, %p296
    %p299 = scmp.ne.s32.totalorder %s284, %s298
    %p300 = scmp.eq.s32.totalorder %s43, 0
    %p301 = por %p299, %p300
    %s303 = sadd.s32 %s302, 1
    %p306 = scmp.eq.s32.totalorder %s37, 1
    %p307 = scmp.ne.s32.totalorder %s302, %s304
    %p308 = scmp.eq.s32.totalorder %s37, 0
    %p309 = por %p307, %p308
    %p310 = scmp.ne.s32.totalorder %s302, %s304
    %p311 = scmp.eq.s32.totalorder %s42, 1
    %p312 = por %p310, %p311
    %p313 = scmp.ne.s32.totalorder %s304, %s305
    %p314 = scmp.eq.s32.totalorder %s42, 0
    %p315 = por %p313, %p314
    %p316 = scmp.ne.s32.totalorder %s304, %s305
    %p317 = scmp.eq.s32.totalorder %s43, 1
    %p318 = por %p316, %p317
    %p320 = scmp.ne.s32.totalorder %s305, %s319
    %p321 = scmp.eq.s32.totalorder %s43, 0
    %p322 = por %p320, %p321
    %s324 = sadd.s32 %s323, 1
    %p327 = scmp.eq.s32.totalorder %s37, 1
    %p328 = scmp.ne.s32.totalorder %s323, %s325
    %p329 = scmp.eq.s32.totalorder %s37, 0
    %p330 = por %p328, %p329
    %p331 = scmp.ne.s32.totalorder %s323, %s325
    %p332 = scmp.eq.s32.totalorder %s42, 1
    %p333 = por %p331, %p332
    %p334 = scmp.ne.s32.totalorder %s325, %s326
    %p335 = scmp.eq.s32.totalorder %s42, 0
    %p336 = por %p334, %p335
    %p337 = scmp.ne.s32.totalorder %s325, %s326
    %p338 = scmp.eq.s32.totalorder %s43, 1
    %p339 = por %p337, %p338
    %p341 = scmp.ne.s32.totalorder %s326, %s340
    %p342 = scmp.eq.s32.totalorder %s43, 0
    %p343 = por %p341, %p342
    %s345 = sadd.s32 %s344, 1
    %p348 = scmp.eq.s32.totalorder %s37, 1
    %p349 = scmp.ne.s32.totalorder %s344, %s346
    %p350 = scmp.eq.s32.totalorder %s37, 0
    %p351 = por %p349, %p350
    %p352 = scmp.ne.s32.totalorder %s344, %s346
    %p353 = scmp.eq.s32.totalorder %s42, 1
    %p354 = por %p352, %p353
    %p355 = scmp.ne.s32.totalorder %s346, %s347
    %p356 = scmp.eq.s32.totalorder %s42, 0
    %p357 = por %p355, %p356
    %p358 = scmp.ne.s32.totalorder %s346, %s347
    %p359 = scmp.eq.s32.totalorder %s43, 1
    %p360 = por %p358, %p359
    %p362 = scmp.ne.s32.totalorder %s347, %s361
    %p363 = scmp.eq.s32.totalorder %s43, 0
    %p364 = por %p362, %p363
    %s366 = sadd.s32 %s365, 1
    %p369 = scmp.eq.s32.totalorder %s37, 1
    %p370 = scmp.ne.s32.totalorder %s365, %s367
    %p371 = scmp.eq.s32.totalorder %s37, 0
    %p372 = por %p370, %p371
    %p373 = scmp.ne.s32.totalorder %s365, %s367
    %p374 = scmp.eq.s32.totalorder %s42, 1
    %p375 = por %p373, %p374
    %p376 = scmp.ne.s32.totalorder %s367, %s368
    %p377 = scmp.eq.s32.totalorder %s42, 0
    %p378 = por %p376, %p377
    %p379 = scmp.ne.s32.totalorder %s367, %s368
    %p380 = scmp.eq.s32.totalorder %s43, 1
    %p381 = por %p379, %p380
    %p383 = scmp.ne.s32.totalorder %s368, %s382
    %p384 = scmp.eq.s32.totalorder %s43, 0
    %p385 = por %p383, %p384
    %s387 = sadd.s32 %s386, 1
    %p390 = scmp.eq.s32.totalorder %s37, 1
    %p391 = scmp.ne.s32.totalorder %s386, %s388
    %p392 = scmp.eq.s32.totalorder %s37, 0
    %p393 = por %p391, %p392
    %p394 = scmp.ne.s32.totalorder %s386, %s388
    %p395 = scmp.eq.s32.totalorder %s42, 1
    %p396 = por %p394, %p395
    %p397 = scmp.ne.s32.totalorder %s388, %s389
    %p398 = scmp.eq.s32.totalorder %s42, 0
    %p399 = por %p397, %p398
    %p400 = scmp.ne.s32.totalorder %s388, %s389
    %p401 = scmp.eq.s32.totalorder %s43, 1
    %p402 = por %p400, %p401
    %p404 = scmp.ne.s32.totalorder %s389, %s403
    %p405 = scmp.eq.s32.totalorder %s43, 0
    %p406 = por %p404, %p405
    %s408 = sadd.s32 %s407, 1
    %p411 = scmp.eq.s32.totalorder %s37, 1
    %p412 = scmp.ne.s32.totalorder %s407, %s409
    %p413 = scmp.eq.s32.totalorder %s37, 0
    %p414 = por %p412, %p413
    %p415 = scmp.ne.s32.totalorder %s407, %s409
    %p416 = scmp.eq.s32.totalorder %s42, 1
    %p417 = por %p415, %p416
    %p418 = scmp.ne.s32.totalorder %s409, %s410
    %p419 = scmp.eq.s32.totalorder %s42, 0
    %p420 = por %p418, %p419
    %p421 = scmp.ne.s32.totalorder %s409, %s410
    %p422 = scmp.eq.s32.totalorder %s43, 1
    %p423 = por %p421, %p422
    %p425 = scmp.ne.s32.totalorder %s410, %s424
    %p426 = scmp.eq.s32.totalorder %s43, 0
    %p427 = por %p425, %p426
    %s429 = sadd.s32 %s428, 1
    %p432 = scmp.eq.s32.totalorder %s37, 1
    %p433 = scmp.ne.s32.totalorder %s428, %s430
    %p434 = scmp.eq.s32.totalorder %s37, 0
    %p435 = por %p433, %p434
    %p436 = scmp.ne.s32.totalorder %s428, %s430
    %p437 = scmp.eq.s32.totalorder %s42, 1
    %p438 = por %p436, %p437
    %p439 = scmp.ne.s32.totalorder %s430, %s431
    %p440 = scmp.eq.s32.totalorder %s42, 0
    %p441 = por %p439, %p440
    %p442 = scmp.ne.s32.totalorder %s430, %s431
    %p443 = scmp.eq.s32.totalorder %s43, 1
    %p444 = por %p442, %p443
    %p446 = scmp.ne.s32.totalorder %s431, %s445
    %p447 = scmp.eq.s32.totalorder %s43, 0
    %p448 = por %p446, %p447
    %s450 = sadd.s32 %s449, 1
    %p453 = scmp.eq.s32.totalorder %s37, 1
    %p454 = scmp.ne.s32.totalorder %s449, %s451
    %p455 = scmp.eq.s32.totalorder %s37, 0
    %p456 = por %p454, %p455
    %p457 = scmp.ne.s32.totalorder %s449, %s451
    %p458 = scmp.eq.s32.totalorder %s42, 1
    %p459 = por %p457, %p458
    %p460 = scmp.ne.s32.totalorder %s451, %s452
    %p461 = scmp.eq.s32.totalorder %s42, 0
    %p462 = por %p460, %p461
    %p463 = scmp.ne.s32.totalorder %s451, %s452
    %p464 = scmp.eq.s32.totalorder %s43, 1
    %p465 = por %p463, %p464
    %p467 = scmp.ne.s32.totalorder %s452, %s466
    %p468 = scmp.eq.s32.totalorder %s43, 0
    %p469 = por %p467, %p468
    %s470 = ssub.s32 %s37, %s44
    %p471 = scmp.eq.s32.totalorder %s470, 0
    %s473 = sadd.s32 %s472, 1
    %s474 = scalar_select %p471, %s472, %s473
    %p477 = pneg %p471
    %p478 = scmp.eq.s32.totalorder %s37, 1
    %p479 = por %p477, %p478
    %p480 = scmp.ne.s32.totalorder %s472, %s475
    %p481 = scmp.eq.s32.totalorder %s37, 0
    %p482 = por %p480, %p481
    %p483 = scmp.ne.s32.totalorder %s472, %s475
    %p484 = scmp.eq.s32.totalorder %s42, 1
    %p485 = por %p483, %p484
    %p486 = scmp.ne.s32.totalorder %s475, %s476
    %p487 = scmp.eq.s32.totalorder %s42, 0
    %p488 = por %p486, %p487
    %p489 = scmp.ne.s32.totalorder %s475, %s476
    %p490 = scmp.eq.s32.totalorder %s43, 1
    %p491 = por %p489, %p490
    %p493 = scmp.ne.s32.totalorder %s476, %s492
    %p494 = scmp.eq.s32.totalorder %s43, 0
    %p495 = por %p493, %p494
    %s496 = ssub.s32 %s37, %s44
    %p497 = scmp.eq.s32.totalorder %s496, 0
    %s499 = sadd.s32 %s498, 1
    %s500 = scalar_select %p497, %s498, %s499
    %p503 = pneg %p497
    %p504 = scmp.eq.s32.totalorder %s37, 1
    %p505 = por %p503, %p504
    %p506 = scmp.ne.s32.totalorder %s498, %s501
    %p507 = scmp.eq.s32.totalorder %s37, 0
    %p508 = por %p506, %p507
    %p509 = scmp.ne.s32.totalorder %s498, %s501
    %p510 = scmp.eq.s32.totalorder %s42, 1
    %p511 = por %p509, %p510
    %p512 = scmp.ne.s32.totalorder %s501, %s502
    %p513 = scmp.eq.s32.totalorder %s42, 0
    %p514 = por %p512, %p513
    %p515 = scmp.ne.s32.totalorder %s501, %s502
    %p516 = scmp.eq.s32.totalorder %s43, 1
    %p517 = por %p515, %p516
    %p519 = scmp.ne.s32.totalorder %s502, %s518
    %p520 = scmp.eq.s32.totalorder %s43, 0
    %p521 = por %p519, %p520
    %p522 = scmp.le.s32.totalorder 1, %s37
    %p523 = scmp.lt.s32.totalorder %s37, 3
    %p524 = pnand %p522, %p523
    %p525 = pneg %p524
    // Predicated region
    $region9: #{parallel_tacotron2_forward.1} parent=5 // pred_check
      _
    $region10: #{parallel_tacotron2_forward.1} parent=5 // pred_check_branch
      %527 = sbr.rel (%p524) target = $region12
    $region11: #{parallel_tacotron2_forward.1} parent=5 // pred_region
      %s528 = ssub.s32 %s37, 1
      // Predicated region
      $region13: #{parallel_tacotron2_forward.1} parent=11 // pred_check
        %p529 = pneg %p84
      $region14: #{parallel_tacotron2_forward.1} parent=11 // pred_check_branch
        %531 = sbr.rel (%p529) target = $region16
      $region15: #{parallel_tacotron2_forward.1} parent=11 // pred_region
        _
      $region16: #{parallel_tacotron2_forward.1} parent=11 // pred_fallthru
        _
      // Predicated region
      $region17: #{parallel_tacotron2_forward.1} parent=11 // pred_check
        %p532 = pneg %p105
      $region18: #{parallel_tacotron2_forward.1} parent=11 // pred_check_branch
        %534 = sbr.rel (%p532) target = $region20
      $region19: #{parallel_tacotron2_forward.1} parent=11 // pred_region
        _
      $region20: #{parallel_tacotron2_forward.1} parent=11 // pred_fallthru
        _
      // Predicated region
      $region21: #{parallel_tacotron2_forward.1} parent=11 // pred_check
        %p535 = pneg %p126
      $region22: #{parallel_tacotron2_forward.1} parent=11 // pred_check_branch
        %537 = sbr.rel (%p535) target = $region24
      $region23: #{parallel_tacotron2_forward.1} parent=11 // pred_region
        _
      $region24: #{parallel_tacotron2_forward.1} parent=11 // pred_fallthru
        _
      // Predicated region
      $region25: #{parallel_tacotron2_forward.1} parent=11 // pred_check
        %p538 = pneg %p147
      $region26: #{parallel_tacotron2_forward.1} parent=11 // pred_check_branch
        %540 = sbr.rel (%p538) target = $region28
      $region27: #{parallel_tacotron2_forward.1} parent=11 // pred_region
        _
      $region28: #{parallel_tacotron2_forward.1} parent=11 // pred_fallthru
        _
      // Predicated region
      $region29: #{parallel_tacotron2_forward.1} parent=11 // pred_check
        %p541 = pneg %p168
      $region30: #{parallel_tacotron2_forward.1} parent=11 // pred_check_branch
        %543 = sbr.rel (%p541) target = $region32
      $region31: #{parallel_tacotron2_forward.1} parent=11 // pred_region
        _
      $region32: #{parallel_tacotron2_forward.1} parent=11 // pred_fallthru
        _
      // Predicated region
      $region33: #{parallel_tacotron2_forward.1} parent=11 // pred_check
        %p544 = pneg %p189
      $region34: #{parallel_tacotron2_forward.1} parent=11 // pred_check_branch
        %546 = sbr.rel (%p544) target = $region36
      $region35: #{parallel_tacotron2_forward.1} parent=11 // pred_region
        _
      $region36: #{parallel_tacotron2_forward.1} parent=11 // pred_fallthru
        _
      // Predicated region
      $region37: #{parallel_tacotron2_forward.1} parent=11 // pred_check
        %p547 = pneg %p210
      $region38: #{parallel_tacotron2_forward.1} parent=11 // pred_check_branch
        %549 = sbr.rel (%p547) target = $region40
      $region39: #{parallel_tacotron2_forward.1} parent=11 // pred_region
        _
      $region40: #{parallel_tacotron2_forward.1} parent=11 // pred_fallthru
        _
      // Predicated region
      $region41: #{parallel_tacotron2_forward.1} parent=11 // pred_check
        %p550 = pneg %p231
      $region42: #{parallel_tacotron2_forward.1} parent=11 // pred_check_branch
        %552 = sbr.rel (%p550) target = $region44
      $region43: #{parallel_tacotron2_forward.1} parent=11 // pred_region
        _
      $region44: #{parallel_tacotron2_forward.1} parent=11 // pred_fallthru
        _
      // Predicated region
      $region45: #{parallel_tacotron2_forward.1} parent=11 // pred_check
        %p553 = pneg %p252
      $region46: #{parallel_tacotron2_forward.1} parent=11 // pred_check_branch
        %555 = sbr.rel (%p553) target = $region48
      $region47: #{parallel_tacotron2_forward.1} parent=11 // pred_region
        _
      $region48: #{parallel_tacotron2_forward.1} parent=11 // pred_fallthru
        _
      // Predicated region
      $region49: #{parallel_tacotron2_forward.1} parent=11 // pred_check
        %p556 = pneg %p273
      $region50: #{parallel_tacotron2_forward.1} parent=11 // pred_check_branch
        %558 = sbr.rel (%p556) target = $region52
      $region51: #{parallel_tacotron2_forward.1} parent=11 // pred_region
        _
      $region52: #{parallel_tacotron2_forward.1} parent=11 // pred_fallthru
        _
      // Predicated region
      $region53: #{parallel_tacotron2_forward.1} parent=11 // pred_check
        %p559 = pneg %p294
      $region54: #{parallel_tacotron2_forward.1} parent=11 // pred_check_branch
        %561 = sbr.rel (%p559) target = $region56
      $region55: #{parallel_tacotron2_forward.1} parent=11 // pred_region
        _
      $region56: #{parallel_tacotron2_forward.1} parent=11 // pred_fallthru
        _
      // Predicated region
      $region57: #{parallel_tacotron2_forward.1} parent=11 // pred_check
        %p562 = pneg %p315
      $region58: #{parallel_tacotron2_forward.1} parent=11 // pred_check_branch
        %564 = sbr.rel (%p562) target = $region60
      $region59: #{parallel_tacotron2_forward.1} parent=11 // pred_region
        _
      $region60: #{parallel_tacotron2_forward.1} parent=11 // pred_fallthru
        _
      // Predicated region
      $region61: #{parallel_tacotron2_forward.1} parent=11 // pred_check
        %p565 = pneg %p336
      $region62: #{parallel_tacotron2_forward.1} parent=11 // pred_check_branch
        %567 = sbr.rel (%p565) target = $region64
      $region63: #{parallel_tacotron2_forward.1} parent=11 // pred_region
        _
      $region64: #{parallel_tacotron2_forward.1} parent=11 // pred_fallthru
        _
      // Predicated region
      $region65: #{parallel_tacotron2_forward.1} parent=11 // pred_check
        %p568 = pneg %p357
      $region66: #{parallel_tacotron2_forward.1} parent=11 // pred_check_branch
        %570 = sbr.rel (%p568) target = $region68
      $region67: #{parallel_tacotron2_forward.1} parent=11 // pred_region
        _
      $region68: #{parallel_tacotron2_forward.1} parent=11 // pred_fallthru
        _
      // Predicated region
      $region69: #{parallel_tacotron2_forward.1} parent=11 // pred_check
        %p571 = pneg %p378
      $region70: #{parallel_tacotron2_forward.1} parent=11 // pred_check_branch
        %573 = sbr.rel (%p571) target = $region72
      $region71: #{parallel_tacotron2_forward.1} parent=11 // pred_region
        _
      $region72: #{parallel_tacotron2_forward.1} parent=11 // pred_fallthru
        _
      // Predicated region
      $region73: #{parallel_tacotron2_forward.1} parent=11 // pred_check
        %p574 = pneg %p399
      $region74: #{parallel_tacotron2_forward.1} parent=11 // pred_check_branch
        %576 = sbr.rel (%p574) target = $region76
      $region75: #{parallel_tacotron2_forward.1} parent=11 // pred_region
        _
      $region76: #{parallel_tacotron2_forward.1} parent=11 // pred_fallthru
        _
      // Predicated region
      $region77: #{parallel_tacotron2_forward.1} parent=11 // pred_check
        %p577 = pneg %p420
      $region78: #{parallel_tacotron2_forward.1} parent=11 // pred_check_branch
        %579 = sbr.rel (%p577) target = $region80
      $region79: #{parallel_tacotron2_forward.1} parent=11 // pred_region
        _
      $region80: #{parallel_tacotron2_forward.1} parent=11 // pred_fallthru
        _
      // Predicated region
      $region81: #{parallel_tacotron2_forward.1} parent=11 // pred_check
        %p580 = pneg %p441
      $region82: #{parallel_tacotron2_forward.1} parent=11 // pred_check_branch
        %582 = sbr.rel (%p580) target = $region84
      $region83: #{parallel_tacotron2_forward.1} parent=11 // pred_region
        _
      $region84: #{parallel_tacotron2_forward.1} parent=11 // pred_fallthru
        _
      // Predicated region
      $region85: #{parallel_tacotron2_forward.1} parent=11 // pred_check
        %p583 = pneg %p462
      $region86: #{parallel_tacotron2_forward.1} parent=11 // pred_check_branch
        %585 = sbr.rel (%p583) target = $region88
      $region87: #{parallel_tacotron2_forward.1} parent=11 // pred_region
        _
      $region88: #{parallel_tacotron2_forward.1} parent=11 // pred_fallthru
        _
    $region12: #{parallel_tacotron2_forward.1} parent=5 // pred_fallthru
      _
    %p586 = scmp.lt.s32.totalorder %s37, 2
    // Predicated region
    $region89: #{parallel_tacotron2_forward.1} parent=5 // pred_check
      %p587 = pneg %p586
    $region90: #{parallel_tacotron2_forward.1} parent=5 // pred_check_branch
      %589 = sbr.rel (%p587) target = $region92
    $region91: #{parallel_tacotron2_forward.1} parent=5 // pred_region
      // Predicated region
      $region93: #{parallel_tacotron2_forward.1} parent=91 // pred_check
        %p590 = pneg %p57
      $region94: #{parallel_tacotron2_forward.1} parent=91 // pred_check_branch
        %592 = sbr.rel (%p590) target = $region96
      $region95: #{parallel_tacotron2_forward.1} parent=91 // pred_region
        %p593 = scmp.lt.s32.totalorder %s37, 1
        %s594 = scalar_select %p593, %s37, 1
        %s595 = smul.addr %s594, 8
        %s596 = scalar_lea.vmem %s1, %s595
      $region96: #{parallel_tacotron2_forward.1} parent=91 // pred_fallthru
        _
    $region92: #{parallel_tacotron2_forward.1} parent=5 // pred_fallthru
      _
    %p597 = scmp.le.s32.totalorder 1, %s37
    %p598 = scmp.lt.s32.totalorder %s37, 3
    %p599 = pnand %p597, %p598
    %p600 = pneg %p599
    // Predicated region
    $region97: #{parallel_tacotron2_forward.1} parent=5 // pred_check
      _
    $region98: #{parallel_tacotron2_forward.1} parent=5 // pred_check_branch
      %602 = sbr.rel (%p599) target = $region100
    $region99: #{parallel_tacotron2_forward.1} parent=5 // pred_region
      %s603 = ssub.s32 %s37, 1
      %p604 = scmp.lt.s32.totalorder %s42, 1
      %s605 = scalar_select %p604, %s42, 1
      %s606 = smul.addr %s605, 8
      %s607 = scalar_lea.vmem %s1, %s606
      %p608 = pneg %p63
      %p609 = pneg %p60
      %p610 = pneg %p84
      %p611 = pneg %p81
      %p612 = pneg %p105
      %p613 = pneg %p102
      %p614 = pneg %p126
      %p615 = pneg %p123
      %p616 = pneg %p147
      %p617 = pneg %p144
      %p618 = pneg %p168
      %p619 = pneg %p165
      %p620 = pneg %p189
      %p621 = pneg %p186
      %p622 = pneg %p210
      %p623 = pneg %p207
      %p624 = pneg %p231
      %p625 = pneg %p228
      %p626 = pneg %p252
      %p627 = pneg %p249
      %p628 = pneg %p273
      %p629 = pneg %p270
      %p630 = pneg %p294
      %p631 = pneg %p291
      %p632 = pneg %p315
      %p633 = pneg %p312
      %p634 = pneg %p336
      %p635 = pneg %p333
      %p636 = pneg %p357
      %p637 = pneg %p354
      %p638 = pneg %p378
      %p639 = pneg %p375
      %p640 = pneg %p399
      %p641 = pneg %p396
      %p642 = pneg %p420
      %p643 = pneg %p417
      %p644 = pneg %p441
      %p645 = pneg %p438
      %p646 = pneg %p462
      %p647 = pneg %p459
      %p648 = pneg %p488
      %p649 = pneg %p485
      %s650 = smul.u32 3, %s42
      %p651 = scmp.lt.s32.totalorder %s650, 5
      %s652 = scalar_select %p651, %s650, 5
      %s653 = smul.addr %s652, 8
      %s654 = scalar_lea.vmem %s21, %s653
      %p655 = pneg %p514
      %p656 = pneg %p511
      %p657 = scmp.lt.s32.totalorder %s42, 1
      %s658 = scalar_select %p657, %s42, 1
      %s659 = smul.addr %s658, 8
      %s660 = scalar_lea.vmem %s22, %s659
      %p661 = scmp.lt.s32.totalorder %s42, 1
      %s662 = scalar_select %p661, %s42, 1
      %s663 = smul.addr %s662, 8
      %s664 = scalar_lea.vmem %s1, %s663
      %s665 = smul.u32 3, %s42
      %p666 = scmp.lt.s32.totalorder %s665, 5
      %s667 = scalar_select %p666, %s665, 5
      %s668 = smul.addr %s667, 8
      %s669 = scalar_lea.vmem %s21, %s668
      %s670 = smul.u32 3, %s42
      %p671 = scmp.lt.s32.totalorder %s42, 1
      %s672 = scalar_select %p671, %s42, 1
      %s673 = smul.addr %s672, 8
      %s674 = scalar_lea.vmem %s22, %s673
      %s676 = sld [smem:[#allocation3 + %s42]]
      %v677 = vlaneseq
      %v678 = vshrl.u32 %v677, 7
      %v679 = vstv %s676
      %vm680 = vcmp.lt.s32.totalorder %v678, %v679
      %v681 = vsel %vm680, 1, 0
      %v682 = vcvt.s32.f32 %v681
      %v683 = vld [vmem:[%s664] sm:$0xff]
      %v684 = vmul.f32 %v683, %v682
      %v685 = vld [vmem:[%s2] sm:$0xf]
      %v686 = vld [vmem:[%s2 + $0x4] sm:$0xf]
      %v687 = vld [vmem:[%s2 + $0x8] sm:$0xf]
      %v688 = vld [vmem:[%s2 + $0xc] sm:$0xf]
      %v689 = vld [vmem:[%s2 + $0x10] sm:$0xf]
      %v690 = vld [vmem:[%s2 + $0x14] sm:$0xf]
      %v691 = vld [vmem:[%s3] sm:$0x1]
      %vm692 = vcmp.ge.s32.totalorder %v678, 1
      %v693 = vrot.slane %v684, 7
      %v694 = vsel %vm692, 1, 0
      %vm695 = vcmp.eq.s32.totalorder %v694, 1
      %v696 = vsel %vm695, %v693, 0.0
      %vm697 = vcmp.le.s32.totalorder %v678, 6
      %v698 = vrot.slane %v684, 1
      %v699 = vsel %vm697, 1, 0
      %vm700 = vcmp.eq.s32.totalorder %v699, 1
      %v701 = vsel %vm700, %v698, 0.0
      %703 = vrot.lane.b32.xlu0 %v684, 16
      %v704 = vpop.permute.xlu0 %703
      %707 = vrot.lane.b32.xlu0 %v701, 32
      %v708 = vpop.permute.xlu0 %707
      %vm710 = vcmask 130048
      %v711 = vsel %vm710, %v696, %v704
      %vm712 = vcmask 261120
      %v713 = vsel %vm712, %v711, %v708
      %v714 = vpack.c.bf16 %v713, %v713
      %v716 = vlaneseq
      %v717 = vshrl.u32 %v716, 7
      %v718 = vsub.s32 0, %v717
      %v719 = vrot.slane %v691, %v718
      %v727 = vunpack.c.l.b16 %v685
      %v728 = vunpack.c.l.b16 %v686
      %v729 = vunpack.c.l.b16 %v687
      %v730 = vunpack.c.l.b16 %v688
      %v731 = vunpack.c.l.b16 %v689
      %v732 = vunpack.c.l.b16 %v690
      %v733 = vpack.c.b16 %v728, %v727
      %v734 = vpack.c.b16 %v730, %v729
      %v735 = vpack.c.b16 %v732, %v731
      %vm739 = vcmask 392192
      %v741 = vsel %vm739, %v714, 0
      %743 = vmatprep.subr.bf16.mxu0 0
      %744 = vmatpush1.bf16.msra.mxu0 %v733
      %745 = vmatprep.subr.bf16.mxu0 0
      %746 = vmatpush1.bf16.msra.mxu0 %v734
      %747 = vmatprep.subr.bf16.mxu0 0
      %748 = vmatpush1.bf16.msra.mxu0 %v735
      %749 = vmatprep.subr.bf16.mxu0 0
      %750 = vmatpush1.bf16.msra.mxu0 0
      %751 = vmatprep.subr.bf16.mxu0 0
      %752 = vmatpush1.bf16.msra.mxu0 0
      %753 = vmatprep.subr.bf16.mxu0 0
      %754 = vmatpush1.bf16.msra.mxu0 0
      %755 = vmatprep.subr.bf16.mxu0 0
      %756 = vmatpush1.bf16.msra.mxu0 0
      %757 = vmatprep.subr.bf16.mxu0 0
      %758 = vmatpush1.bf16.msra.mxu0 0
      %759 = vmatprep.subr.bf16.mxu0 0
      %760 = vmatpush1.bf16.msra.mxu0 0
      %761 = vmatprep.subr.bf16.mxu0 0
      %762 = vmatpush1.bf16.msra.mxu0 0
      %763 = vmatprep.subr.bf16.mxu0 0
      %764 = vmatpush1.bf16.msra.mxu0 0
      %765 = vmatprep.subr.bf16.mxu0 0
      %766 = vmatpush1.bf16.msra.mxu0 0
      %767 = vmatprep.subr.bf16.mxu0 0
      %768 = vmatpush1.bf16.msra.mxu0 0
      %769 = vmatprep.subr.bf16.mxu0 0
      %770 = vmatpush1.bf16.msra.mxu0 0
      %771 = vmatprep.subr.bf16.mxu0 0
      %772 = vmatpush1.bf16.msra.mxu0 0
      %773 = vmatprep.subr.bf16.mxu0 0
      %774 = vmatpush1.bf16.msra.mxu0 0
      %775 = vmatprep.mubr.bf16.mxu0 0
      %776 = vmatmul.mubr.bf16.gmra.mrb[0].mxu0 %v741
      %v777 = vpop.f32.mrb[0].mxu0
      %v778 = vadd.f32 %v719, %v777
      %v779 = vpop.f32.mrb[0].mxu0
      %v780 = vpop.f32.mrb[0].mxu0
      %v781 = vpop.f32.mrb[0].mxu0
      %782 = vdwg.mxu0
      %v783 = vmax.f32 %v778, 0.0
      %v784 = vpack.c.bf16 %v783, %v783
      %v785 = vld [vmem:[%s4] sm:$0xf]
      %v786 = vld [vmem:[%s4 + $0x4] sm:$0xf]
      %v787 = vld [vmem:[%s5] sm:$0x1]
      %v789 = vlaneseq
      %v790 = vshrl.u32 %v789, 7
      %v791 = vsub.s32 0, %v790
      %v792 = vrot.slane %v787, %v791
      %v796 = vunpack.c.l.b16 %v785
      %v797 = vunpack.c.l.b16 %v786
      %v798 = vpack.c.b16 %v797, %v796
      %v801 = vsel %vm710, %v784, 0
      %803 = vmatprep.subr.bf16.mxu0 0
      %804 = vmatpush1.bf16.msra.mxu0 %v798
      %805 = vmatprep.subr.bf16.mxu0 0
      %806 = vmatpush1.bf16.msra.mxu0 0
      %807 = vmatprep.subr.bf16.mxu0 0
      %808 = vmatpush1.bf16.msra.mxu0 0
      %809 = vmatprep.subr.bf16.mxu0 0
      %810 = vmatpush1.bf16.msra.mxu0 0
      %811 = vmatprep.subr.bf16.mxu0 0
      %812 = vmatpush1.bf16.msra.mxu0 0
      %813 = vmatprep.subr.bf16.mxu0 0
      %814 = vmatpush1.bf16.msra.mxu0 0
      %815 = vmatprep.subr.bf16.mxu0 0
      %816 = vmatpush1.bf16.msra.mxu0 0
      %817 = vmatprep.subr.bf16.mxu0 0
      %818 = vmatpush1.bf16.msra.mxu0 0
      %819 = vmatprep.subr.bf16.mxu0 0
      %820 = vmatpush1.bf16.msra.mxu0 0
      %821 = vmatprep.subr.bf16.mxu0 0
      %822 = vmatpush1.bf16.msra.mxu0 0
      %823 = vmatprep.subr.bf16.mxu0 0
      %824 = vmatpush1.bf16.msra.mxu0 0
      %825 = vmatprep.subr.bf16.mxu0 0
      %826 = vmatpush1.bf16.msra.mxu0 0
      %827 = vmatprep.subr.bf16.mxu0 0
      %828 = vmatpush1.bf16.msra.mxu0 0
      %829 = vmatprep.subr.bf16.mxu0 0
      %830 = vmatpush1.bf16.msra.mxu0 0
      %831 = vmatprep.subr.bf16.mxu0 0
      %832 = vmatpush1.bf16.msra.mxu0 0
      %833 = vmatprep.subr.bf16.mxu0 0
      %834 = vmatpush1.bf16.msra.mxu0 0
      %835 = vmatprep.mubr.bf16.mxu0 0
      %836 = vmatmul.mubr.bf16.gmra.mrb[0].mxu0 %v801
      %v837 = vpop.f32.mrb[0].mxu0
      %v838 = vadd.f32 %v792, %v837
      %v839 = vpop.f32.mrb[0].mxu0
      %v840 = vpop.f32.mrb[0].mxu0
      %v841 = vpop.f32.mrb[0].mxu0
      %842 = vdwg.mxu0
      %v843 = vmul.f32 %v838, %v682
      %v844 = vld [vmem:[%s6] sm:$0x1]
      %v846 = vlaneseq
      %v847 = vshrl.u32 %v846, 7
      %v848 = vsub.s32 0, %v847
      %v849 = vrot.slane %v844, %v848
      %v851 = vadd.f32 %v843, %v849
      %v852 = vld [vmem:[%s7] sm:$0xf]
      %v853 = vld [vmem:[%s7 + $0x4] sm:$0xf]
      %v854 = vld [vmem:[%s7 + $0x8] sm:$0xf]
      %v855 = vld [vmem:[%s7 + $0xc] sm:$0xf]
      %v856 = vld [vmem:[%s7 + $0x10] sm:$0xf]
      %v857 = vld [vmem:[%s7 + $0x14] sm:$0xf]
      %v858 = vld [vmem:[%s8] sm:$0x1]
      %v859 = vrot.slane %v851, 7
      %v860 = vsel %vm695, %v859, 0.0
      %v861 = vrot.slane %v851, 1
      %v862 = vsel %vm700, %v861, 0.0
      %864 = vrot.lane.b32.xlu0 %v851, 16
      %v865 = vpop.permute.xlu0 %864
      %868 = vrot.lane.b32.xlu0 %v862, 32
      %v869 = vpop.permute.xlu0 %868
      %v871 = vsel %vm710, %v860, %v865
      %v872 = vsel %vm712, %v871, %v869
      %v873 = vpack.c.bf16 %v872, %v872
      %v875 = vlaneseq
      %v876 = vshrl.u32 %v875, 7
      %v877 = vsub.s32 0, %v876
      %v878 = vrot.slane %v858, %v877
      %v886 = vunpack.c.l.b16 %v852
      %v887 = vunpack.c.l.b16 %v853
      %v888 = vunpack.c.l.b16 %v854
      %v889 = vunpack.c.l.b16 %v855
      %v890 = vunpack.c.l.b16 %v856
      %v891 = vunpack.c.l.b16 %v857
      %v892 = vpack.c.b16 %v887, %v886
      %v893 = vpack.c.b16 %v889, %v888
      %v894 = vpack.c.b16 %v891, %v890
      %v899 = vsel %vm739, %v873, 0
      %901 = vmatprep.subr.bf16.mxu0 0
      %902 = vmatpush1.bf16.msra.mxu0 %v892
      %903 = vmatprep.subr.bf16.mxu0 0
      %904 = vmatpush1.bf16.msra.mxu0 %v893
      %905 = vmatprep.subr.bf16.mxu0 0
      %906 = vmatpush1.bf16.msra.mxu0 %v894
      %907 = vmatprep.subr.bf16.mxu0 0
      %908 = vmatpush1.bf16.msra.mxu0 0
      %909 = vmatprep.subr.bf16.mxu0 0
      %910 = vmatpush1.bf16.msra.mxu0 0
      %911 = vmatprep.subr.bf16.mxu0 0
      %912 = vmatpush1.bf16.msra.mxu0 0
      %913 = vmatprep.subr.bf16.mxu0 0
      %914 = vmatpush1.bf16.msra.mxu0 0
      %915 = vmatprep.subr.bf16.mxu0 0
      %916 = vmatpush1.bf16.msra.mxu0 0
      %917 = vmatprep.subr.bf16.mxu0 0
      %918 = vmatpush1.bf16.msra.mxu0 0
      %919 = vmatprep.subr.bf16.mxu0 0
      %920 = vmatpush1.bf16.msra.mxu0 0
      %921 = vmatprep.subr.bf16.mxu0 0
      %922 = vmatpush1.bf16.msra.mxu0 0
      %923 = vmatprep.subr.bf16.mxu0 0
      %924 = vmatpush1.bf16.msra.mxu0 0
      %925 = vmatprep.subr.bf16.mxu0 0
      %926 = vmatpush1.bf16.msra.mxu0 0
      %927 = vmatprep.subr.bf16.mxu0 0
      %928 = vmatpush1.bf16.msra.mxu0 0
      %929 = vmatprep.subr.bf16.mxu0 0
      %930 = vmatpush1.bf16.msra.mxu0 0
      %931 = vmatprep.subr.bf16.mxu0 0
      %932 = vmatpush1.bf16.msra.mxu0 0
      %933 = vmatprep.mubr.bf16.mxu0 0
      %934 = vmatmul.mubr.bf16.gmra.mrb[0].mxu0 %v899
      %v935 = vpop.f32.mrb[0].mxu0
      %v936 = vadd.f32 %v878, %v935
      %v937 = vpop.f32.mrb[0].mxu0
      %v938 = vpop.f32.mrb[0].mxu0
      %v939 = vpop.f32.mrb[0].mxu0
      %940 = vdwg.mxu0
      %v941 = vmax.f32 %v936, 0.0
      %v942 = vld [vmem:[%s9] sm:$0xf]
      %v943 = vld [vmem:[%s9 + $0x4] sm:$0xf]
      %v944 = vld [vmem:[%s9 + $0x8] sm:$0xf]
      %v945 = vld [vmem:[%s9 + $0xc] sm:$0xf]
      %v946 = vld [vmem:[%s9 + $0x10] sm:$0xf]
      %v947 = vld [vmem:[%s9 + $0x14] sm:$0xf]
      %v948 = vld [vmem:[%s10] sm:$0x1]
      %v949 = vrot.slane %v941, 7
      %v950 = vsel %vm695, %v949, 0.0
      %v951 = vrot.slane %v941, 1
      %v952 = vsel %vm700, %v951, 0.0
      %954 = vrot.lane.b32.xlu0 %v941, 16
      %v955 = vpop.permute.xlu0 %954
      %958 = vrot.lane.b32.xlu0 %v952, 32
      %v959 = vpop.permute.xlu0 %958
      %v961 = vsel %vm710, %v950, %v955
      %v962 = vsel %vm712, %v961, %v959
      %v963 = vpack.c.bf16 %v962, %v962
      %v965 = vlaneseq
      %v966 = vshrl.u32 %v965, 7
      %v967 = vsub.s32 0, %v966
      %v968 = vrot.slane %v948, %v967
      %v976 = vunpack.c.l.b16 %v942
      %v977 = vunpack.c.l.b16 %v943
      %v978 = vunpack.c.l.b16 %v944
      %v979 = vunpack.c.l.b16 %v945
      %v980 = vunpack.c.l.b16 %v946
      %v981 = vunpack.c.l.b16 %v947
      %v982 = vpack.c.b16 %v977, %v976
      %v983 = vpack.c.b16 %v979, %v978
      %v984 = vpack.c.b16 %v981, %v980
      %v989 = vsel %vm739, %v963, 0
      %991 = vmatprep.subr.bf16.mxu0 0
      %992 = vmatpush1.bf16.msra.mxu0 %v982
      %993 = vmatprep.subr.bf16.mxu0 0
      %994 = vmatpush1.bf16.msra.mxu0 %v983
      %995 = vmatprep.subr.bf16.mxu0 0
      %996 = vmatpush1.bf16.msra.mxu0 %v984
      %997 = vmatprep.subr.bf16.mxu0 0
      %998 = vmatpush1.bf16.msra.mxu0 0
      %999 = vmatprep.subr.bf16.mxu0 0
      %1000 = vmatpush1.bf16.msra.mxu0 0
      %1001 = vmatprep.subr.bf16.mxu0 0
      %1002 = vmatpush1.bf16.msra.mxu0 0
      %1003 = vmatprep.subr.bf16.mxu0 0
      %1004 = vmatpush1.bf16.msra.mxu0 0
      %1005 = vmatprep.subr.bf16.mxu0 0
      %1006 = vmatpush1.bf16.msra.mxu0 0
      %1007 = vmatprep.subr.bf16.mxu0 0
      %1008 = vmatpush1.bf16.msra.mxu0 0
      %1009 = vmatprep.subr.bf16.mxu0 0
      %1010 = vmatpush1.bf16.msra.mxu0 0
      %1011 = vmatprep.subr.bf16.mxu0 0
      %1012 = vmatpush1.bf16.msra.mxu0 0
      %1013 = vmatprep.subr.bf16.mxu0 0
      %1014 = vmatpush1.bf16.msra.mxu0 0
      %1015 = vmatprep.subr.bf16.mxu0 0
      %1016 = vmatpush1.bf16.msra.mxu0 0
      %1017 = vmatprep.subr.bf16.mxu0 0
      %1018 = vmatpush1.bf16.msra.mxu0 0
      %1019 = vmatprep.subr.bf16.mxu0 0
      %1020 = vmatpush1.bf16.msra.mxu0 0
      %1021 = vmatprep.subr.bf16.mxu0 0
      %1022 = vmatpush1.bf16.msra.mxu0 0
      %1023 = vmatprep.mubr.bf16.mxu0 0
      %1024 = vmatmul.mubr.bf16.gmra.mrb[0].mxu0 %v989
      %v1025 = vpop.f32.mrb[0].mxu0
      %v1026 = vadd.f32 %v968, %v1025
      %v1027 = vpop.f32.mrb[0].mxu0
      %v1028 = vpop.f32.mrb[0].mxu0
      %v1029 = vpop.f32.mrb[0].mxu0
      %1030 = vdwg.mxu0
      %v1031 = vmax.f32 %v1026, 0.0
      %v1032 = vld [vmem:[%s11] sm:$0xf]
      %v1033 = vld [vmem:[%s11 + $0x4] sm:$0xf]
      %v1034 = vld [vmem:[#allocation4] sm:$0x1]
      %v1035 = vpack.c.bf16 %v1031, %v1031
      %v1037 = vlaneseq
      %v1038 = vshrl.u32 %v1037, 7
      %v1039 = vsub.s32 0, %v1038
      %v1040 = vrot.slane %v1034, %v1039
      %v1044 = vunpack.c.l.b16 %v1032
      %v1045 = vunpack.c.l.b16 %v1033
      %v1046 = vpack.c.b16 %v1045, %v1044
      %v1049 = vsel %vm710, %v1035, 0
      %1051 = vmatprep.subr.bf16.mxu0 0
      %1052 = vmatpush1.bf16.msra.mxu0 %v1046
      %1053 = vmatprep.subr.bf16.mxu0 0
      %1054 = vmatpush1.bf16.msra.mxu0 0
      %1055 = vmatprep.subr.bf16.mxu0 0
      %1056 = vmatpush1.bf16.msra.mxu0 0
      %1057 = vmatprep.subr.bf16.mxu0 0
      %1058 = vmatpush1.bf16.msra.mxu0 0
      %1059 = vmatprep.subr.bf16.mxu0 0
      %1060 = vmatpush1.bf16.msra.mxu0 0
      %1061 = vmatprep.subr.bf16.mxu0 0
      %1062 = vmatpush1.bf16.msra.mxu0 0
      %1063 = vmatprep.subr.bf16.mxu0 0
      %1064 = vmatpush1.bf16.msra.mxu0 0
      %1065 = vmatprep.subr.bf16.mxu0 0
      %1066 = vmatpush1.bf16.msra.mxu0 0
      %1067 = vmatprep.subr.bf16.mxu0 0
      %1068 = vmatpush1.bf16.msra.mxu0 0
      %1069 = vmatprep.subr.bf16.mxu0 0
      %1070 = vmatpush1.bf16.msra.mxu0 0
      %1071 = vmatprep.subr.bf16.mxu0 0
      %1072 = vmatpush1.bf16.msra.mxu0 0
      %1073 = vmatprep.subr.bf16.mxu0 0
      %1074 = vmatpush1.bf16.msra.mxu0 0
      %1075 = vmatprep.subr.bf16.mxu0 0
      %1076 = vmatpush1.bf16.msra.mxu0 0
      %1077 = vmatprep.subr.bf16.mxu0 0
      %1078 = vmatpush1.bf16.msra.mxu0 0
      %1079 = vmatprep.subr.bf16.mxu0 0
      %1080 = vmatpush1.bf16.msra.mxu0 0
      %1081 = vmatprep.subr.bf16.mxu0 0
      %1082 = vmatpush1.bf16.msra.mxu0 0
      %1083 = vmatprep.mubr.bf16.mxu0 0
      %1084 = vmatmul.mubr.bf16.gmra.mrb[0].mxu0 %v1049
      %v1085 = vpop.f32.mrb[0].mxu0
      %v1086 = vadd.f32 %v1040, %v1085
      %v1087 = vpop.f32.mrb[0].mxu0
      %v1088 = vpop.f32.mrb[0].mxu0
      %v1089 = vpop.f32.mrb[0].mxu0
      %1090 = vdwg.mxu0
      %v1091 = vand.u32 2147483647, %v1086
      %v1092 = vsub.f32 0.0, %v1091
      %v1093 = vmul.f32 %v1092, 1.442695
      %v1094 = vpow.pop %v1093
      %v1095 = vadd.f32 %v1094, 1.0
      %v1096 = vlog2.pop %v1095
      %v1097 = vmul.f32 %v1096, 0.6931472
      %v1098 = vmax.f32 %v1086, 0.0
      %v1099 = vadd.f32 %v1097, %v1098
      %v1100 = vmul.f32 %v1099, %v682
      %v1101 = vld [vmem:[%s13] sm:$0xf]
      %v1102 = vld [vmem:[%s13 + $0x4] sm:$0xf]
      %v1103 = vld [vmem:[%s14] sm:$0x1]
      %v1105 = vlaneseq
      %v1106 = vshrl.u32 %v1105, 7
      %v1107 = vsub.s32 0, %v1106
      %v1108 = vrot.slane %v1103, %v1107
      %v1112 = vunpack.c.l.b16 %v1101
      %v1113 = vunpack.c.l.b16 %v1102
      %v1114 = vpack.c.b16 %v1113, %v1112
      %1116 = vmatprep.subr.bf16.mxu0 0
      %1117 = vmatpush1.bf16.msra.mxu0 %v1114
      %1118 = vmatprep.subr.bf16.mxu0 0
      %1119 = vmatpush1.bf16.msra.mxu0 0
      %1120 = vmatprep.subr.bf16.mxu0 0
      %1121 = vmatpush1.bf16.msra.mxu0 0
      %1122 = vmatprep.subr.bf16.mxu0 0
      %1123 = vmatpush1.bf16.msra.mxu0 0
      %1124 = vmatprep.subr.bf16.mxu0 0
      %1125 = vmatpush1.bf16.msra.mxu0 0
      %1126 = vmatprep.subr.bf16.mxu0 0
      %1127 = vmatpush1.bf16.msra.mxu0 0
      %1128 = vmatprep.subr.bf16.mxu0 0
      %1129 = vmatpush1.bf16.msra.mxu0 0
      %1130 = vmatprep.subr.bf16.mxu0 0
      %1131 = vmatpush1.bf16.msra.mxu0 0
      %1132 = vmatprep.subr.bf16.mxu0 0
      %1133 = vmatpush1.bf16.msra.mxu0 0
      %1134 = vmatprep.subr.bf16.mxu0 0
      %1135 = vmatpush1.bf16.msra.mxu0 0
      %1136 = vmatprep.subr.bf16.mxu0 0
      %1137 = vmatpush1.bf16.msra.mxu0 0
      %1138 = vmatprep.subr.bf16.mxu0 0
      %1139 = vmatpush1.bf16.msra.mxu0 0
      %1140 = vmatprep.subr.bf16.mxu0 0
      %1141 = vmatpush1.bf16.msra.mxu0 0
      %1142 = vmatprep.subr.bf16.mxu0 0
      %1143 = vmatpush1.bf16.msra.mxu0 0
      %1144 = vmatprep.subr.bf16.mxu0 0
      %1145 = vmatpush1.bf16.msra.mxu0 0
      %1146 = vmatprep.subr.bf16.mxu0 0
      %1147 = vmatpush1.bf16.msra.mxu0 0
      %1148 = vmatprep.mubr.bf16.mxu0 0
      %1149 = vmatmul.mubr.bf16.gmra.mrb[0].mxu0 %v1049
      %v1150 = vpop.f32.mrb[0].mxu0
      %v1151 = vadd.f32 %v1108, %v1150
      %v1152 = vpop.f32.mrb[0].mxu0
      %v1153 = vpop.f32.mrb[0].mxu0
      %v1154 = vpop.f32.mrb[0].mxu0
      %1155 = vdwg.mxu0
      %v1156 = vlaneseq
      %v1157 = vand.u32 %v1156, 127
      %vm1158 = vcmp.le.s32.totalorder %v678, %v1157
      %v1159 = vsel %vm1158, 1, 0
      %v1160 = vcvt.s32.f32 %v1159
      %vm1161 = vcmp.eq.s32.totalorder %v678, %v1157
      %v1162 = vsel %vm1161, 1, 0
      %v1163 = vcvt.s32.f32 %v1162
      %v1164 = vmul.f32 %v1163, 0.5
      %v1165 = vsub.f32 %v1160, %v1164
      %1167 = vset.pattern.permute.xlu0 0
      %1168 = vperm.xlu0 %1167, %v1100
      %v1169 = vpop.permute.xlu0 %1168
      %v1171 = vmul.f32 %v1165, %v1169
      %vm1172 = vcmask 64512
      %v1174 = vsel %vm1172, 1.0, 0
      %1176 = vmatprep.subr.mxu0 0.0
      %1177 = vmatpush1.msra.mxu0 %v1171
      %1178 = vmatprep.subr.mxu0 0.0
      %1179 = vmatpush1.msra.mxu0 0.0
      %1180 = vmatprep.subr.mxu0 0.0
      %1181 = vmatpush1.msra.mxu0 0.0
      %1182 = vmatprep.subr.mxu0 0.0
      %1183 = vmatpush1.msra.mxu0 0.0
      %1184 = vmatprep.subr.mxu0 0.0
      %1185 = vmatpush1.msra.mxu0 0.0
      %1186 = vmatprep.subr.mxu0 0.0
      %1187 = vmatpush1.msra.mxu0 0.0
      %1188 = vmatprep.subr.mxu0 0.0
      %1189 = vmatpush1.msra.mxu0 0.0
      %1190 = vmatprep.subr.mxu0 0.0
      %1191 = vmatpush1.msra.mxu0 0.0
      %1192 = vmatprep.subr.mxu0 0.0
      %1193 = vmatpush1.msra.mxu0 0.0
      %1194 = vmatprep.subr.mxu0 0.0
      %1195 = vmatpush1.msra.mxu0 0.0
      %1196 = vmatprep.subr.mxu0 0.0
      %1197 = vmatpush1.msra.mxu0 0.0
      %1198 = vmatprep.subr.mxu0 0.0
      %1199 = vmatpush1.msra.mxu0 0.0
      %1200 = vmatprep.subr.mxu0 0.0
      %1201 = vmatpush1.msra.mxu0 0.0
      %1202 = vmatprep.subr.mxu0 0.0
      %1203 = vmatpush1.msra.mxu0 0.0
      %1204 = vmatprep.subr.mxu0 0.0
      %1205 = vmatpush1.msra.mxu0 0.0
      %1206 = vmatprep.subr.mxu0 0.0
      %1207 = vmatpush1.msra.mxu0 0.0
      %1208 = vmatprep.subr.mxu0 0.0
      %1209 = vmatpush1.msra.mxu0 0.0
      %1210 = vmatprep.subr.mxu0 0.0
      %1211 = vmatpush1.msra.mxu0 0.0
      %1212 = vmatprep.subr.mxu0 0.0
      %1213 = vmatpush1.msra.mxu0 0.0
      %1214 = vmatprep.subr.mxu0 0.0
      %1215 = vmatpush1.msra.mxu0 0.0
      %1216 = vmatprep.subr.mxu0 0.0
      %1217 = vmatpush1.msra.mxu0 0.0
      %1218 = vmatprep.subr.mxu0 0.0
      %1219 = vmatpush1.msra.mxu0 0.0
      %1220 = vmatprep.subr.mxu0 0.0
      %1221 = vmatpush1.msra.mxu0 0.0
      %1222 = vmatprep.subr.mxu0 0.0
      %1223 = vmatpush1.msra.mxu0 0.0
      %1224 = vmatprep.subr.mxu0 0.0
      %1225 = vmatpush1.msra.mxu0 0.0
      %1226 = vmatprep.subr.mxu0 0.0
      %1227 = vmatpush1.msra.mxu0 0.0
      %1228 = vmatprep.subr.mxu0 0.0
      %1229 = vmatpush1.msra.mxu0 0.0
      %1230 = vmatprep.subr.mxu0 0.0
      %1231 = vmatpush1.msra.mxu0 0.0
      %1232 = vmatprep.subr.mxu0 0.0
      %1233 = vmatpush1.msra.mxu0 0.0
      %1234 = vmatprep.subr.mxu0 0.0
      %1235 = vmatpush1.msra.mxu0 0.0
      %1236 = vmatprep.subr.mxu0 0.0
      %1237 = vmatpush1.msra.mxu0 0.0
      %1238 = vmatprep.subr.mxu0 0.0
      %1239 = vmatpush1.msra.mxu0 0.0
      %1240 = vmatprep.mubr.f32.mxu0 0.0
      %1241 = vmatmul.mubr.f32.gmra.mrb[0].mxu0 %v1174
      %v1242 = vpop.f32.mrb[0].mxu0
      %v1243 = vadd.f32 0.0, %v1242
      %v1244 = vpop.f32.mrb[0].mxu0
      %1245 = vdwg.mxu0
      %1246 = vmatprep.subr.mxu0 0.0
      %1247 = vmatpush1.msra.mxu0 %v1100
      %1248 = vmatprep.subr.mxu0 0.0
      %1249 = vmatpush1.msra.mxu0 0.0
      %1250 = vmatprep.subr.mxu0 0.0
      %1251 = vmatpush1.msra.mxu0 0.0
      %1252 = vmatprep.subr.mxu0 0.0
      %1253 = vmatpush1.msra.mxu0 0.0
      %1254 = vmatprep.subr.mxu0 0.0
      %1255 = vmatpush1.msra.mxu0 0.0
      %1256 = vmatprep.subr.mxu0 0.0
      %1257 = vmatpush1.msra.mxu0 0.0
      %1258 = vmatprep.subr.mxu0 0.0
      %1259 = vmatpush1.msra.mxu0 0.0
      %1260 = vmatprep.subr.mxu0 0.0
      %1261 = vmatpush1.msra.mxu0 0.0
      %1262 = vmatprep.subr.mxu0 0.0
      %1263 = vmatpush1.msra.mxu0 0.0
      %1264 = vmatprep.subr.mxu0 0.0
      %1265 = vmatpush1.msra.mxu0 0.0
      %1266 = vmatprep.subr.mxu0 0.0
      %1267 = vmatpush1.msra.mxu0 0.0
      %1268 = vmatprep.subr.mxu0 0.0
      %1269 = vmatpush1.msra.mxu0 0.0
      %1270 = vmatprep.subr.mxu0 0.0
      %1271 = vmatpush1.msra.mxu0 0.0
      %1272 = vmatprep.subr.mxu0 0.0
      %1273 = vmatpush1.msra.mxu0 0.0
      %1274 = vmatprep.subr.mxu0 0.0
      %1275 = vmatpush1.msra.mxu0 0.0
      %1276 = vmatprep.subr.mxu0 0.0
      %1277 = vmatpush1.msra.mxu0 0.0
      %1278 = vmatprep.subr.mxu0 0.0
      %1279 = vmatpush1.msra.mxu0 0.0
      %1280 = vmatprep.subr.mxu0 0.0
      %1281 = vmatpush1.msra.mxu0 0.0
      %1282 = vmatprep.subr.mxu0 0.0
      %1283 = vmatpush1.msra.mxu0 0.0
      %1284 = vmatprep.subr.mxu0 0.0
      %1285 = vmatpush1.msra.mxu0 0.0
      %1286 = vmatprep.subr.mxu0 0.0
      %1287 = vmatpush1.msra.mxu0 0.0
      %1288 = vmatprep.subr.mxu0 0.0
      %1289 = vmatpush1.msra.mxu0 0.0
      %1290 = vmatprep.subr.mxu0 0.0
      %1291 = vmatpush1.msra.mxu0 0.0
      %1292 = vmatprep.subr.mxu0 0.0
      %1293 = vmatpush1.msra.mxu0 0.0
      %1294 = vmatprep.subr.mxu0 0.0
      %1295 = vmatpush1.msra.mxu0 0.0
      %1296 = vmatprep.subr.mxu0 0.0
      %1297 = vmatpush1.msra.mxu0 0.0
      %1298 = vmatprep.subr.mxu0 0.0
      %1299 = vmatpush1.msra.mxu0 0.0
      %1300 = vmatprep.subr.mxu0 0.0
      %1301 = vmatpush1.msra.mxu0 0.0
      %1302 = vmatprep.subr.mxu0 0.0
      %1303 = vmatpush1.msra.mxu0 0.0
      %1304 = vmatprep.subr.mxu0 0.0
      %1305 = vmatpush1.msra.mxu0 0.0
      %1306 = vmatprep.subr.mxu0 0.0
      %1307 = vmatpush1.msra.mxu0 0.0
      %1308 = vmatprep.subr.mxu0 0.0
      %1309 = vmatpush1.msra.mxu0 0.0
      %1310 = vmatprep.mubr.f32.mxu0 0.0
      %1311 = vmatmul.mubr.f32.gmra.mrb[0].mxu0 %v1174
      %v1312 = vpop.f32.mrb[0].mxu0
      %v1313 = vadd.f32 0.0, %v1312
      %v1314 = vpop.f32.mrb[0].mxu0
      %1315 = vdwg.mxu0
      %v1316 = vadd.s32 %v678, 8
      %v1317 = vadd.s32 %v678, 16
      %v1318 = vcvt.s32.f32 %v678
      %v1319 = vcvt.s32.f32 %v1316
      %v1320 = vcvt.s32.f32 %v1317
      %v1321 = vadd.f32 %v1318, 0.5
      %v1322 = vadd.f32 %v1319, 0.5
      %v1323 = vadd.f32 %v1320, 0.5
      %v1324 = vlaneseq
      %v1325 = vshrl.u32 %v1324, 7
      %v1326 = vsub.s32 0, %v1325
      %v1327 = vrot.slane %v1243, %v1326
      %v1328 = vsub.f32 %v1321, %v1327
      %v1329 = vsub.f32 %v1322, %v1327
      %v1330 = vsub.f32 %v1323, %v1327
      %v1331 = vmul.f32 %v1328, %v1328
      %v1332 = vmul.f32 %v1329, %v1329
      %v1333 = vmul.f32 %v1330, %v1330
      %v1334 = vsub.f32 0.0, %v1331
      %v1335 = vsub.f32 0.0, %v1332
      %v1336 = vsub.f32 0.0, %v1333
      %vm1337 = vcmp.lt.s32.totalorder %v1157, %v679
      %v1338 = vsel %vm1337, %v1334, -1e+09
      %v1339 = vsel %vm1337, %v1335, -1e+09
      %v1340 = vsel %vm1337, %v1336, -1e+09
      %v1341 = vsel %vm1172, %v1338, -inf
      %1342 = vmax.xlane.f32.xlu0 %v1341
      %v1343 = vpop.xlane.xlu0 %1342
      %v1344 = vsel %vm1172, %v1339, -inf
      %1345 = vmax.xlane.f32.xlu0 %v1344
      %v1346 = vpop.xlane.xlu0 %1345
      %v1347 = vsel %vm1172, %v1340, -inf
      %1348 = vmax.xlane.f32.xlu0 %v1347
      %v1349 = vpop.xlane.xlu0 %1348
      %v1350 = vsub.f32 %v1338, %v1343
      %v1351 = vsub.f32 %v1339, %v1346
      %v1352 = vsub.f32 %v1340, %v1349
      %v1353 = vmul.f32 %v1350, 1.442695
      %v1354 = vpow.pop %v1353
      %v1355 = vmul.f32 %v1351, 1.442695
      %v1356 = vpow.pop %v1355
      %v1357 = vmul.f32 %v1352, 1.442695
      %v1358 = vpow.pop %v1357
      %v1359 = vsel %vm1172, %v1354, 0.0
      %1360 = vadd.xlane.f32.xlu0 %v1359
      %v1361 = vpop.xlane.xlu0 %1360
      %v1362 = vsel %vm1172, %v1356, 0.0
      %1363 = vadd.xlane.f32.xlu0 %v1362
      %v1364 = vpop.xlane.xlu0 %1363
      %v1365 = vsel %vm1172, %v1358, 0.0
      %1366 = vadd.xlane.f32.xlu0 %v1365
      %v1367 = vpop.xlane.xlu0 %1366
      %v1368 = vrcp.pop %v1361
      %v1369 = vrcp.pop %v1364
      %v1370 = vrcp.pop %v1367
      %v1371 = vmul.f32 %v1354, %v1368
      %v1372 = vmul.f32 %v1356, %v1369
      %v1373 = vmul.f32 %v1358, %v1370
      %v1374 = vpack.c.bf16 %v1372, %v1371
      %v1375 = vpack.c.bf16 %v1373, %v1373
      %v1376 = vpack.c.bf16 %v1151, %v1151
      %v1378 = vsel %vm1172, %v1374, 0
      %v1381 = vsel %vm1172, %v1375, 0
      %vm1383 = vcmask 1043456
      %v1385 = vsel %vm1383, %v1376, 0
      %1387 = vmatprep.subr.bf16.mxu0 0
      %1388 = vmatpush1.bf16.msra.mxu0 %v1385
      %1389 = vmatprep.subr.bf16.mxu0 0
      %1390 = vmatpush1.bf16.msra.mxu0 0
      %1391 = vmatprep.subr.bf16.mxu0 0
      %1392 = vmatpush1.bf16.msra.mxu0 0
      %1393 = vmatprep.subr.bf16.mxu0 0
      %1394 = vmatpush1.bf16.msra.mxu0 0
      %1395 = vmatprep.subr.bf16.mxu0 0
      %1396 = vmatpush1.bf16.msra.mxu0 0
      %1397 = vmatprep.subr.bf16.mxu0 0
      %1398 = vmatpush1.bf16.msra.mxu0 0
      %1399 = vmatprep.subr.bf16.mxu0 0
      %1400 = vmatpush1.bf16.msra.mxu0 0
      %1401 = vmatprep.subr.bf16.mxu0 0
      %1402 = vmatpush1.bf16.msra.mxu0 0
      %1403 = vmatprep.subr.bf16.mxu0 0
      %1404 = vmatpush1.bf16.msra.mxu0 0
      %1405 = vmatprep.subr.bf16.mxu0 0
      %1406 = vmatpush1.bf16.msra.mxu0 0
      %1407 = vmatprep.subr.bf16.mxu0 0
      %1408 = vmatpush1.bf16.msra.mxu0 0
      %1409 = vmatprep.subr.bf16.mxu0 0
      %1410 = vmatpush1.bf16.msra.mxu0 0
      %1411 = vmatprep.subr.bf16.mxu0 0
      %1412 = vmatpush1.bf16.msra.mxu0 0
      %1413 = vmatprep.subr.bf16.mxu0 0
      %1414 = vmatpush1.bf16.msra.mxu0 0
      %1415 = vmatprep.subr.bf16.mxu0 0
      %1416 = vmatpush1.bf16.msra.mxu0 0
      %1417 = vmatprep.subr.bf16.mxu0 0
      %1418 = vmatpush1.bf16.msra.mxu0 0
      %1419 = vmatprep.mubr.bf16.mxu0 0
      %1420 = vmatmul.mubr.bf16.gmra.mrb[0].mxu0 %v1378
      %v1421 = vpop.f32.mrb[0].mxu0
      %v1422 = vadd.f32 0.0, %v1421
      %v1423 = vpop.f32.mrb[0].mxu0
      %v1424 = vpop.f32.mrb[0].mxu0
      %v1425 = vadd.f32 0.0, %v1424
      %v1426 = vpop.f32.mrb[0].mxu0
      %1427 = vmatprep.mubr.bf16.mxu0 0
      %1428 = vmatmul.mubr.bf16.gmra.mrb[0].mxu0 %v1381
      %v1429 = vpop.f32.mrb[0].mxu0
      %v1430 = vadd.f32 0.0, %v1429
      %v1431 = vpop.f32.mrb[0].mxu0
      %v1432 = vpop.f32.mrb[0].mxu0
      %v1433 = vpop.f32.mrb[0].mxu0
      %1434 = vdwg.mxu0
      %v1435 = vsub.f32 %v1321, 0.5
      %v1436 = vsub.f32 %v1322, 0.5
      %v1437 = vsub.f32 %v1323, 0.5
      %v1438 = vlaneseq
      %v1439 = vshrl.u32 %v1438, 7
      %v1440 = vsub.s32 0, %v1439
      %v1441 = vrot.slane %v1313, %v1440
      %vm1442 = vcmp.lt.f32.partialorder %v1435, %v1441
      %vm1443 = vcmp.lt.f32.partialorder %v1436, %v1441
      %vm1444 = vcmp.lt.f32.partialorder %v1437, %v1441
      %v1445 = vsel %vm1442, 1, 0
      %v1446 = vsel %vm1443, 1, 0
      %v1447 = vsel %vm1444, 1, 0
      %v1448 = vcvt.s32.f32 %v1445
      %v1449 = vcvt.s32.f32 %v1446
      %v1450 = vcvt.s32.f32 %v1447
      %1452 = vset.pattern.permute.xlu0 0
      %1453 = vperm.xlu0 %1452, %v1448
      %v1454 = vpop.permute.xlu0 %1453
      %1457 = vset.pattern.permute.xlu0 0
      %1458 = vperm.xlu0 %1457, %v1449
      %v1459 = vpop.permute.xlu0 %1458
      %1462 = vset.pattern.permute.xlu0 0
      %1463 = vperm.xlu0 %1462, %v1450
      %v1464 = vpop.permute.xlu0 %1463
      %v1466 = vmul.f32 %v1422, %v1454
      %v1467 = vmul.f32 %v1425, %v1459
      %v1468 = vmul.f32 %v1430, %v1464
      %v1469 = vld [vmem:[%s15] sm:$0xf]
      %v1470 = vld [vmem:[%s15 + $0x4] sm:$0xf]
      %v1471 = vld [vmem:[%s16] sm:$0x1]
      %v1472 = vpack.c.bf16 %v1467, %v1466
      %v1473 = vpack.c.bf16 %v1468, %v1468
      %v1475 = vlaneseq
      %v1476 = vshrl.u32 %v1475, 7
      %v1477 = vsub.s32 0, %v1476
      %v1478 = vrot.slane %v1471, %v1477
      %v1482 = vunpack.c.l.b16 %v1469
      %v1483 = vunpack.c.l.b16 %v1470
      %v1484 = vpack.c.b16 %v1483, %v1482
      %v1487 = vsel %vm710, %v1472, 0
      %v1490 = vsel %vm710, %v1473, 0
      %1492 = vmatprep.subr.bf16.mxu0 0
      %1493 = vmatpush1.bf16.msra.mxu0 %v1484
      %1494 = vmatprep.subr.bf16.mxu0 0
      %1495 = vmatpush1.bf16.msra.mxu0 0
      %1496 = vmatprep.subr.bf16.mxu0 0
      %1497 = vmatpush1.bf16.msra.mxu0 0
      %1498 = vmatprep.subr.bf16.mxu0 0
      %1499 = vmatpush1.bf16.msra.mxu0 0
      %1500 = vmatprep.subr.bf16.mxu0 0
      %1501 = vmatpush1.bf16.msra.mxu0 0
      %1502 = vmatprep.subr.bf16.mxu0 0
      %1503 = vmatpush1.bf16.msra.mxu0 0
      %1504 = vmatprep.subr.bf16.mxu0 0
      %1505 = vmatpush1.bf16.msra.mxu0 0
      %1506 = vmatprep.subr.bf16.mxu0 0
      %1507 = vmatpush1.bf16.msra.mxu0 0
      %1508 = vmatprep.subr.bf16.mxu0 0
      %1509 = vmatpush1.bf16.msra.mxu0 0
      %1510 = vmatprep.subr.bf16.mxu0 0
      %1511 = vmatpush1.bf16.msra.mxu0 0
      %1512 = vmatprep.subr.bf16.mxu0 0
      %1513 = vmatpush1.bf16.msra.mxu0 0
      %1514 = vmatprep.subr.bf16.mxu0 0
      %1515 = vmatpush1.bf16.msra.mxu0 0
      %1516 = vmatprep.subr.bf16.mxu0 0
      %1517 = vmatpush1.bf16.msra.mxu0 0
      %1518 = vmatprep.subr.bf16.mxu0 0
      %1519 = vmatpush1.bf16.msra.mxu0 0
      %1520 = vmatprep.subr.bf16.mxu0 0
      %1521 = vmatpush1.bf16.msra.mxu0 0
      %1522 = vmatprep.subr.bf16.mxu0 0
      %1523 = vmatpush1.bf16.msra.mxu0 0
      %1524 = vmatprep.mubr.bf16.mxu0 0
      %1525 = vmatmul.mubr.bf16.gmra.mrb[0].mxu0 %v1487
      %v1526 = vpop.f32.mrb[0].mxu0
      %v1527 = vadd.f32 %v1478, %v1526
      %v1528 = vpop.f32.mrb[0].mxu0
      %v1529 = vpop.f32.mrb[0].mxu0
      %v1530 = vadd.f32 %v1478, %v1529
      %v1531 = vpop.f32.mrb[0].mxu0
      %1532 = vmatprep.mubr.bf16.mxu0 0
      %1533 = vmatmul.mubr.bf16.gmra.mrb[0].mxu0 %v1490
      %v1534 = vpop.f32.mrb[0].mxu0
      %v1535 = vadd.f32 %v1478, %v1534
      %v1536 = vpop.f32.mrb[0].mxu0
      %v1537 = vpop.f32.mrb[0].mxu0
      %v1538 = vpop.f32.mrb[0].mxu0
      %1539 = vdwg.mxu0
      %v1540 = vmax.f32 %v1527, 0.0
      %v1541 = vmax.f32 %v1530, 0.0
      %v1542 = vmax.f32 %v1535, 0.0
      %v1543 = vld [vmem:[%s17] sm:$0xf]
      %v1544 = vld [vmem:[%s17 + $0x4] sm:$0xf]
      %v1545 = vld [vmem:[%s17 + $0x8] sm:$0xf]
      %v1546 = vld [vmem:[%s17 + $0xc] sm:$0xf]
      %v1547 = vld [vmem:[%s17 + $0x10] sm:$0xf]
      %v1548 = vld [vmem:[%s17 + $0x14] sm:$0xf]
      %v1549 = vld [vmem:[%s18] sm:$0x1]
      %vm1550 = vcmp.ge.s32.totalorder %v1316, 1
      %vm1551 = vcmp.ge.s32.totalorder %v1317, 1
      %v1552 = vrot.slane %v1540, 7
      %v1553 = vrot.slane %v1541, 7
      %v1554 = vrot.slane %v1542, 7
      %vm1555 = vcmp.lt.s32.totalorder %v678, 1
      %v1556 = vsel %vm1555, %v1553, %v1554
      %v1557 = vsel %vm1555, %v1552, %v1553
      %v1558 = vsel %vm1555, %v1554, %v1552
      %v1559 = vsel %vm1550, 1, 0
      %v1560 = vsel %vm1551, 1, 0
      %vm1561 = vcmp.eq.s32.totalorder %v1559, 1
      %vm1562 = vcmp.eq.s32.totalorder %v1560, 1
      %v1563 = vsel %vm695, %v1558, 0.0
      %v1564 = vsel %vm1561, %v1557, 0.0
      %v1565 = vsel %vm1562, %v1556, 0.0
      %vm1566 = vcmp.le.s32.totalorder %v678, 22
      %vm1567 = vcmp.le.s32.totalorder %v1316, 22
      %vm1568 = vcmp.le.s32.totalorder %v1317, 22
      %v1569 = vrot.slane %v1540, 1
      %v1570 = vrot.slane %v1541, 1
      %v1571 = vrot.slane %v1542, 1
      %vm1572 = vcmp.lt.s32.totalorder %v678, 7
      %v1573 = vsel %vm1572, %v1570, %v1571
      %v1574 = vsel %vm1572, %v1569, %v1570
      %v1575 = vsel %vm1572, %v1571, %v1569
      %v1576 = vsel %vm1566, 1, 0
      %v1577 = vsel %vm1567, 1, 0
      %v1578 = vsel %vm1568, 1, 0
      %vm1579 = vcmp.eq.s32.totalorder %v1576, 1
      %vm1580 = vcmp.eq.s32.totalorder %v1577, 1
      %vm1581 = vcmp.eq.s32.totalorder %v1578, 1
      %v1582 = vsel %vm1579, %v1574, 0.0
      %v1583 = vsel %vm1580, %v1573, 0.0
      %v1584 = vsel %vm1581, %v1575, 0.0
      %1588 = vrot.lane.b32.xlu0 %v1540, 16
      %v1589 = vpop.permute.xlu0 %1588
      %1590 = vrot.lane.b32.xlu0 %v1541, 16
      %v1591 = vpop.permute.xlu0 %1590
      %1592 = vrot.lane.b32.xlu0 %v1542, 16
      %v1593 = vpop.permute.xlu0 %1592
      %1600 = vrot.lane.b32.xlu0 %v1582, 32
      %v1601 = vpop.permute.xlu0 %1600
      %1602 = vrot.lane.b32.xlu0 %v1583, 32
      %v1603 = vpop.permute.xlu0 %1602
      %1604 = vrot.lane.b32.xlu0 %v1584, 32
      %v1605 = vpop.permute.xlu0 %1604
      %v1609 = vsel %vm710, %v1563, %v1589
      %v1610 = vsel %vm710, %v1564, %v1591
      %v1611 = vsel %vm710, %v1565, %v1593
      %v1612 = vsel %vm712, %v1609, %v1601
      %v1613 = vsel %vm712, %v1610, %v1603
      %v1614 = vsel %vm712, %v1611, %v1605
      %v1615 = vpack.c.bf16 %v1613, %v1612
      %v1616 = vpack.c.bf16 %v1614, %v1614
      %v1618 = vlaneseq
      %v1619 = vshrl.u32 %v1618, 7
      %v1620 = vsub.s32 0, %v1619
      %v1621 = vrot.slane %v1549, %v1620
      %v1629 = vunpack.c.l.b16 %v1543
      %v1630 = vunpack.c.l.b16 %v1544
      %v1631 = vunpack.c.l.b16 %v1545
      %v1632 = vunpack.c.l.b16 %v1546
      %v1633 = vunpack.c.l.b16 %v1547
      %v1634 = vunpack.c.l.b16 %v1548
      %v1635 = vpack.c.b16 %v1630, %v1629
      %v1636 = vpack.c.b16 %v1632, %v1631
      %v1637 = vpack.c.b16 %v1634, %v1633
      %v1642 = vsel %vm739, %v1615, 0
      %v1645 = vsel %vm739, %v1616, 0
      %1647 = vmatprep.subr.bf16.mxu0 0
      %1648 = vmatpush1.bf16.msra.mxu0 %v1635
      %1649 = vmatprep.subr.bf16.mxu0 0
      %1650 = vmatpush1.bf16.msra.mxu0 %v1636
      %1651 = vmatprep.subr.bf16.mxu0 0
      %1652 = vmatpush1.bf16.msra.mxu0 %v1637
      %1653 = vmatprep.subr.bf16.mxu0 0
      %1654 = vmatpush1.bf16.msra.mxu0 0
      %1655 = vmatprep.subr.bf16.mxu0 0
      %1656 = vmatpush1.bf16.msra.mxu0 0
      %1657 = vmatprep.subr.bf16.mxu0 0
      %1658 = vmatpush1.bf16.msra.mxu0 0
      %1659 = vmatprep.subr.bf16.mxu0 0
      %1660 = vmatpush1.bf16.msra.mxu0 0
      %1661 = vmatprep.subr.bf16.mxu0 0
      %1662 = vmatpush1.bf16.msra.mxu0 0
      %1663 = vmatprep.subr.bf16.mxu0 0
      %1664 = vmatpush1.bf16.msra.mxu0 0
      %1665 = vmatprep.subr.bf16.mxu0 0
      %1666 = vmatpush1.bf16.msra.mxu0 0
      %1667 = vmatprep.subr.bf16.mxu0 0
      %1668 = vmatpush1.bf16.msra.mxu0 0
      %1669 = vmatprep.subr.bf16.mxu0 0
      %1670 = vmatpush1.bf16.msra.mxu0 0
      %1671 = vmatprep.subr.bf16.mxu0 0
      %1672 = vmatpush1.bf16.msra.mxu0 0
      %1673 = vmatprep.subr.bf16.mxu0 0
      %1674 = vmatpush1.bf16.msra.mxu0 0
      %1675 = vmatprep.subr.bf16.mxu0 0
      %1676 = vmatpush1.bf16.msra.mxu0 0
      %1677 = vmatprep.subr.bf16.mxu0 0
      %1678 = vmatpush1.bf16.msra.mxu0 0
      %1679 = vmatprep.mubr.bf16.mxu0 0
      %1680 = vmatmul.mubr.bf16.gmra.mrb[0].mxu0 %v1642
      %v1681 = vpop.f32.mrb[0].mxu0
      %v1682 = vadd.f32 %v1621, %v1681
      %v1683 = vpop.f32.mrb[0].mxu0
      %v1684 = vpop.f32.mrb[0].mxu0
      %v1685 = vadd.f32 %v1621, %v1684
      %v1686 = vpop.f32.mrb[0].mxu0
      %1687 = vmatprep.mubr.bf16.mxu0 0
      %1688 = vmatmul.mubr.bf16.gmra.mrb[0].mxu0 %v1645
      %v1689 = vpop.f32.mrb[0].mxu0
      %v1690 = vadd.f32 %v1621, %v1689
      %v1691 = vpop.f32.mrb[0].mxu0
      %v1692 = vpop.f32.mrb[0].mxu0
      %v1693 = vpop.f32.mrb[0].mxu0
      %1694 = vdwg.mxu0
      %v1695 = vmax.f32 %v1682, 0.0
      %v1696 = vmax.f32 %v1685, 0.0
      %v1697 = vmax.f32 %v1690, 0.0
      %s1698 = scalar_lea.vmem %s17, 24
      %v1699 = vld [vmem:[%s1698] sm:$0xf]
      %v1700 = vld [vmem:[%s1698 + $0x4] sm:$0xf]
      %v1701 = vld [vmem:[%s1698 + $0x8] sm:$0xf]
      %v1702 = vld [vmem:[%s1698 + $0xc] sm:$0xf]
      %v1703 = vld [vmem:[%s1698 + $0x10] sm:$0xf]
      %v1704 = vld [vmem:[%s1698 + $0x14] sm:$0xf]
      %s1705 = scalar_lea.vmem %s18, 1
      %v1706 = vld [vmem:[%s1705] sm:$0x1]
      %v1707 = vrot.slane %v1695, 7
      %v1708 = vrot.slane %v1696, 7
      %v1709 = vrot.slane %v1697, 7
      %v1710 = vsel %vm1555, %v1708, %v1709
      %v1711 = vsel %vm1555, %v1707, %v1708
      %v1712 = vsel %vm1555, %v1709, %v1707
      %v1713 = vsel %vm695, %v1712, 0.0
      %v1714 = vsel %vm1561, %v1711, 0.0
      %v1715 = vsel %vm1562, %v1710, 0.0
      %v1716 = vrot.slane %v1695, 1
      %v1717 = vrot.slane %v1696, 1
      %v1718 = vrot.slane %v1697, 1
      %v1719 = vsel %vm1572, %v1717, %v1718
      %v1720 = vsel %vm1572, %v1716, %v1717
      %v1721 = vsel %vm1572, %v1718, %v1716
      %v1722 = vsel %vm1579, %v1720, 0.0
      %v1723 = vsel %vm1580, %v1719, 0.0
      %v1724 = vsel %vm1581, %v1721, 0.0
      %1728 = vrot.lane.b32.xlu0 %v1695, 16
      %v1729 = vpop.permute.xlu0 %1728
      %1730 = vrot.lane.b32.xlu0 %v1696, 16
      %v1731 = vpop.permute.xlu0 %1730
      %1732 = vrot.lane.b32.xlu0 %v1697, 16
      %v1733 = vpop.permute.xlu0 %1732
      %1740 = vrot.lane.b32.xlu0 %v1722, 32
      %v1741 = vpop.permute.xlu0 %1740
      %1742 = vrot.lane.b32.xlu0 %v1723, 32
      %v1743 = vpop.permute.xlu0 %1742
      %1744 = vrot.lane.b32.xlu0 %v1724, 32
      %v1745 = vpop.permute.xlu0 %1744
      %v1749 = vsel %vm710, %v1713, %v1729
      %v1750 = vsel %vm710, %v1714, %v1731
      %v1751 = vsel %vm710, %v1715, %v1733
      %v1752 = vsel %vm712, %v1749, %v1741
      %v1753 = vsel %vm712, %v1750, %v1743
      %v1754 = vsel %vm712, %v1751, %v1745
      %v1755 = vpack.c.bf16 %v1753, %v1752
      %v1756 = vpack.c.bf16 %v1754, %v1754
      %v1758 = vlaneseq
      %v1759 = vshrl.u32 %v1758, 7
      %v1760 = vsub.s32 0, %v1759
      %v1761 = vrot.slane %v1706, %v1760
      %v1769 = vunpack.c.l.b16 %v1699
      %v1770 = vunpack.c.l.b16 %v1700
      %v1771 = vunpack.c.l.b16 %v1701
      %v1772 = vunpack.c.l.b16 %v1702
      %v1773 = vunpack.c.l.b16 %v1703
      %v1774 = vunpack.c.l.b16 %v1704
      %v1775 = vpack.c.b16 %v1770, %v1769
      %v1776 = vpack.c.b16 %v1772, %v1771
      %v1777 = vpack.c.b16 %v1774, %v1773
      %v1782 = vsel %vm739, %v1755, 0
      %v1785 = vsel %vm739, %v1756, 0
      %1787 = vmatprep.subr.bf16.mxu0 0
      %1788 = vmatpush1.bf16.msra.mxu0 %v1775
      %1789 = vmatprep.subr.bf16.mxu0 0
      %1790 = vmatpush1.bf16.msra.mxu0 %v1776
      %1791 = vmatprep.subr.bf16.mxu0 0
      %1792 = vmatpush1.bf16.msra.mxu0 %v1777
      %1793 = vmatprep.subr.bf16.mxu0 0
      %1794 = vmatpush1.bf16.msra.mxu0 0
      %1795 = vmatprep.subr.bf16.mxu0 0
      %1796 = vmatpush1.bf16.msra.mxu0 0
      %1797 = vmatprep.subr.bf16.mxu0 0
      %1798 = vmatpush1.bf16.msra.mxu0 0
      %1799 = vmatprep.subr.bf16.mxu0 0
      %1800 = vmatpush1.bf16.msra.mxu0 0
      %1801 = vmatprep.subr.bf16.mxu0 0
      %1802 = vmatpush1.bf16.msra.mxu0 0
      %1803 = vmatprep.subr.bf16.mxu0 0
      %1804 = vmatpush1.bf16.msra.mxu0 0
      %1805 = vmatprep.subr.bf16.mxu0 0
      %1806 = vmatpush1.bf16.msra.mxu0 0
      %1807 = vmatprep.subr.bf16.mxu0 0
      %1808 = vmatpush1.bf16.msra.mxu0 0
      %1809 = vmatprep.subr.bf16.mxu0 0
      %1810 = vmatpush1.bf16.msra.mxu0 0
      %1811 = vmatprep.subr.bf16.mxu0 0
      %1812 = vmatpush1.bf16.msra.mxu0 0
      %1813 = vmatprep.subr.bf16.mxu0 0
      %1814 = vmatpush1.bf16.msra.mxu0 0
      %1815 = vmatprep.subr.bf16.mxu0 0
      %1816 = vmatpush1.bf16.msra.mxu0 0
      %1817 = vmatprep.subr.bf16.mxu0 0
      %1818 = vmatpush1.bf16.msra.mxu0 0
      %1819 = vmatprep.mubr.bf16.mxu0 0
      %1820 = vmatmul.mubr.bf16.gmra.mrb[0].mxu0 %v1782
      %v1821 = vpop.f32.mrb[0].mxu0
      %v1822 = vadd.f32 %v1761, %v1821
      %v1823 = vpop.f32.mrb[0].mxu0
      %v1824 = vpop.f32.mrb[0].mxu0
      %v1825 = vadd.f32 %v1761, %v1824
      %v1826 = vpop.f32.mrb[0].mxu0
      %1827 = vmatprep.mubr.bf16.mxu0 0
      %1828 = vmatmul.mubr.bf16.gmra.mrb[0].mxu0 %v1785
      %v1829 = vpop.f32.mrb[0].mxu0
      %v1830 = vadd.f32 %v1761, %v1829
      %v1831 = vpop.f32.mrb[0].mxu0
      %v1832 = vpop.f32.mrb[0].mxu0
      %v1833 = vpop.f32.mrb[0].mxu0
      %1834 = vdwg.mxu0
      %v1835 = vmax.f32 %v1822, 0.0
      %v1836 = vmax.f32 %v1825, 0.0
      %v1837 = vmax.f32 %v1830, 0.0
      %v1838 = vpack.c.bf16 %v1836, %v1835
      %v1839 = vpack.c.bf16 %v1837, %v1837
      %v1840 = vld [vmem:[%s19] sm:$0xf]
      %v1841 = vld [vmem:[%s19 + $0x4] sm:$0xf]
      %v1842 = vld [vmem:[%s20] sm:$0x1]
      %v1844 = vlaneseq
      %v1845 = vshrl.u32 %v1844, 7
      %v1846 = vsub.s32 0, %v1845
      %v1847 = vrot.slane %v1842, %v1846
      %v1851 = vunpack.c.l.b16 %v1840
      %v1852 = vunpack.c.l.b16 %v1841
      %v1853 = vpack.c.b16 %v1852, %v1851
      %v1856 = vsel %vm710, %v1838, 0
      %v1859 = vsel %vm710, %v1839, 0
      %1861 = vmatprep.subr.bf16.mxu0 0
      %1862 = vmatpush1.bf16.msra.mxu0 %v1853
      %1863 = vmatprep.subr.bf16.mxu0 0
      %1864 = vmatpush1.bf16.msra.mxu0 0
      %1865 = vmatprep.subr.bf16.mxu0 0
      %1866 = vmatpush1.bf16.msra.mxu0 0
      %1867 = vmatprep.subr.bf16.mxu0 0
      %1868 = vmatpush1.bf16.msra.mxu0 0
      %1869 = vmatprep.subr.bf16.mxu0 0
      %1870 = vmatpush1.bf16.msra.mxu0 0
      %1871 = vmatprep.subr.bf16.mxu0 0
      %1872 = vmatpush1.bf16.msra.mxu0 0
      %1873 = vmatprep.subr.bf16.mxu0 0
      %1874 = vmatpush1.bf16.msra.mxu0 0
      %1875 = vmatprep.subr.bf16.mxu0 0
      %1876 = vmatpush1.bf16.msra.mxu0 0
      %1877 = vmatprep.subr.bf16.mxu0 0
      %1878 = vmatpush1.bf16.msra.mxu0 0
      %1879 = vmatprep.subr.bf16.mxu0 0
      %1880 = vmatpush1.bf16.msra.mxu0 0
      %1881 = vmatprep.subr.bf16.mxu0 0
      %1882 = vmatpush1.bf16.msra.mxu0 0
      %1883 = vmatprep.subr.bf16.mxu0 0
      %1884 = vmatpush1.bf16.msra.mxu0 0
      %1885 = vmatprep.subr.bf16.mxu0 0
      %1886 = vmatpush1.bf16.msra.mxu0 0
      %1887 = vmatprep.subr.bf16.mxu0 0
      %1888 = vmatpush1.bf16.msra.mxu0 0
      %1889 = vmatprep.subr.bf16.mxu0 0
      %1890 = vmatpush1.bf16.msra.mxu0 0
      %1891 = vmatprep.subr.bf16.mxu0 0
      %1892 = vmatpush1.bf16.msra.mxu0 0
      %1893 = vmatprep.mubr.bf16.mxu0 0
      %1894 = vmatmul.mubr.bf16.gmra.mrb[0].mxu0 %v1856
      %v1895 = vpop.f32.mrb[0].mxu0
      %v1896 = vadd.f32 %v1847, %v1895
      %v1897 = vpop.f32.mrb[0].mxu0
      %v1898 = vpop.f32.mrb[0].mxu0
      %v1899 = vadd.f32 %v1847, %v1898
      %v1900 = vpop.f32.mrb[0].mxu0
      %1901 = vmatprep.mubr.bf16.mxu0 0
      %1902 = vmatmul.mubr.bf16.gmra.mrb[0].mxu0 %v1859
      %v1903 = vpop.f32.mrb[0].mxu0
      %v1904 = vadd.f32 %v1847, %v1903
      %v1905 = vpop.f32.mrb[0].mxu0
      %v1906 = vpop.f32.mrb[0].mxu0
      %v1907 = vpop.f32.mrb[0].mxu0
      %1908 = vdwg.mxu0
      %v1909 = vmul.f32 %v1896, %v1454
      %v1910 = vmul.f32 %v1899, %v1459
      %v1911 = vmul.f32 %v1904, %v1464
      %1912 = vst.msk [vmem:[%s669] sm:$0xff] %vm1172, %v1909
      %1913 = vst.msk [vmem:[%s669 + $0x8] sm:$0xff] %vm1172, %v1910
      %1914 = vst.msk [vmem:[%s669 + $0x10] sm:$0xff] %vm1172, %v1911
      %vm1915 = vcmask 7168
      %1916 = vst.msk [vmem:[%s674] sm:$0xff] %vm1915, %v1100
      %s1917 = smul.u32 3, %s42
      %p1918 = scmp.lt.s32.totalorder %s1917, 5
      %s1919 = scalar_select %p1918, %s1917, 5
      %s1920 = smul.addr %s1919, 8
      %s1921 = scalar_lea.vmem %s21, %s1920
      %p1922 = scmp.lt.s32.totalorder %s42, 1
      %s1923 = scalar_select %p1922, %s42, 1
      %s1924 = smul.addr %s1923, 8
      %s1925 = scalar_lea.vmem %s22, %s1924
      // Predicated region
      $region101: #{parallel_tacotron2_forward.1} parent=99 // pred_check
        %p1926 = pneg %p485
      $region102: #{parallel_tacotron2_forward.1} parent=99 // pred_check_branch
        %1928 = sbr.rel (%p1926) target = $region104
      $region103: #{parallel_tacotron2_forward.1} parent=99 // pred_region
        %s1929 = smul.u32 3, %s42
      $region104: #{parallel_tacotron2_forward.1} parent=99 // pred_fallthru
        _
      // Predicated region
      $region105: #{parallel_tacotron2_forward.1} parent=99 // pred_check
        %p1930 = pneg %p511
      $region106: #{parallel_tacotron2_forward.1} parent=99 // pred_check_branch
        %1932 = sbr.rel (%p1930) target = $region108
      $region107: #{parallel_tacotron2_forward.1} parent=99 // pred_region
        _
      $region108: #{parallel_tacotron2_forward.1} parent=99 // pred_fallthru
        _
    $region100: #{parallel_tacotron2_forward.1} parent=5 // pred_fallthru
      _
    %p1933 = scmp.le.s32.totalorder 2, %s37
    // Predicated region
    $region109: #{parallel_tacotron2_forward.1} parent=5 // pred_check
      %p1934 = pneg %p1933
    $region110: #{parallel_tacotron2_forward.1} parent=5 // pred_check_branch
      %1936 = sbr.rel (%p1934) target = $region112
    $region111: #{parallel_tacotron2_forward.1} parent=5 // pred_region
      %s1937 = ssub.s32 %s37, 2
      // Predicated region
      $region113: #{parallel_tacotron2_forward.1} parent=111 // pred_check
        %p1938 = pneg %p491
      $region114: #{parallel_tacotron2_forward.1} parent=111 // pred_check_branch
        %1940 = sbr.rel (%p1938) target = $region116
      $region115: #{parallel_tacotron2_forward.1} parent=111 // pred_region
        %s1941 = smul.u32 3, %s43
        %p1942 = scmp.lt.s32.totalorder %s1941, 5
        %s1943 = scalar_select %p1942, %s1941, 5
        %s1944 = smul.addr %s1943, 8
        %s1945 = scalar_lea.vmem %s21, %s1944
      $region116: #{parallel_tacotron2_forward.1} parent=111 // pred_fallthru
        _
      // Predicated region
      $region117: #{parallel_tacotron2_forward.1} parent=111 // pred_check
        %p1946 = pneg %p517
      $region118: #{parallel_tacotron2_forward.1} parent=111 // pred_check_branch
        %1948 = sbr.rel (%p1946) target = $region120
      $region119: #{parallel_tacotron2_forward.1} parent=111 // pred_region
        %p1949 = scmp.lt.s32.totalorder %s43, 1
        %s1950 = scalar_select %p1949, %s43, 1
        %s1951 = smul.addr %s1950, 8
        %s1952 = scalar_lea.vmem %s22, %s1951
      $region120: #{parallel_tacotron2_forward.1} parent=111 // pred_fallthru
        _
    $region112: #{parallel_tacotron2_forward.1} parent=5 // pred_fallthru
      _
  $region6: #{parallel_tacotron2_forward.1} parent=0 // loop_footer
    %s41 = sadd.s32 1, %s37
  $region7: #{parallel_tacotron2_forward.1} parent=0 // loop_footer_branch
    %36 = sbr.rel target = $region3
  $region8: #{parallel_tacotron2_forward.1} parent=0 // loop_exit
    _

</llo_original>
